<compile_context>
chip_gen: v7x
topology: tpu7x:2x2x1
jax: 0.10.0
libtpu: 0.0.40
codegen_flags: <defaults>
</compile_context>

<pallas_src>
import functools

import jax
import jax.numpy as jnp
from jax.experimental import pallas as pl
from jax.experimental.pallas import tpu as pltpu

LN_EPS = 1e-5


def _energy_predictor_kernel(
    x_ref,      # (1, T, Cin) f32   one batch element of the encoder output
    w1_ref,     # (3, Cin, F) bf16  conv1 weight, tap-major
    w2_ref,     # (3*F, F)    bf16  conv2 weight, tap-major rows (fused K = 3F)
    vec_ref,    # (8, F)      f32   [b1, g1, be1, b2, g2, be2, wl_row, bl(padded)]
    out_ref,    # (1, 1, T)   f32   ReLU'd scalar energy prediction per timestep
    xhalo,      # (T+2, Cin)  bf16  zero-haloed scratch for conv1's time taps
    h2cat,      # (T, 3*F)    bf16  im2col scratch for the fused conv2 matmul
):
    T = out_ref.shape[-1]
    Cin = x_ref.shape[-1]
    F = vec_ref.shape[-1]

    b1, g1, be1 = vec_ref[0:1, :], vec_ref[1:2, :], vec_ref[2:3, :]
    b2, g2, be2 = vec_ref[3:4, :], vec_ref[4:5, :], vec_ref[5:6, :]
    wl = vec_ref[6:7, :]            # (1, F)  final linear weight as a row
    bl = vec_ref[7:8, 0:1]          # (1, 1)  final linear bias

    # ---- Conv1d #1: in-kernel im2col via zero-haloed scratch (no wrapper pad/concat) ----
    xhalo[0:1, :] = jnp.zeros((1, Cin), dtype=xhalo.dtype)
    xhalo[T + 1:T + 2, :] = jnp.zeros((1, Cin), dtype=xhalo.dtype)
    xhalo[1:T + 1, :] = x_ref[0].astype(xhalo.dtype)

    # Sequential accumulation -> single live (T, F) f32 intermediate.
    h = jnp.dot(xhalo[0:T, :], w1_ref[0], preferred_element_type=jnp.float32)
    h = h + jnp.dot(xhalo[1:T + 1, :], w1_ref[1], preferred_element_type=jnp.float32)
    h = h + jnp.dot(xhalo[2:T + 2, :], w1_ref[2], preferred_element_type=jnp.float32)
    h = h + b1                                                     # (T, F) f32

    # ---- LayerNorm over channels (single pass, clamped var) + ReLU ----
    m = jnp.mean(h, axis=-1, keepdims=True)
    v = jnp.maximum(jnp.mean(h * h, axis=-1, keepdims=True) - m * m, 0.0)
    h = (h - m) * jax.lax.rsqrt(v + LN_EPS) * g1 + be1
    h = jnp.maximum(h, 0.0)
    # Dropout: identity in eval mode.

    # ---- Conv1d #2: ONE fused K = 3F MXU matmul via (T, 3F) im2col scratch ----
    h_bf = h.astype(h2cat.dtype)                                   # (T, F) bf16
    h2cat[:, F:2 * F] = h_bf                                       # center tap h[t]
    h2cat[0:1, 0:F] = jnp.zeros((1, F), dtype=h2cat.dtype)         # left tap h[t-1]
    h2cat[1:T, 0:F] = h_bf[0:T - 1, :]
    h2cat[0:T - 1, 2 * F:3 * F] = h_bf[1:T, :]                     # right tap h[t+1]
    h2cat[T - 1:T, 2 * F:3 * F] = jnp.zeros((1, F), dtype=h2cat.dtype)

    h2 = jnp.dot(h2cat[...], w2_ref[...],
                 preferred_element_type=jnp.float32) + b2          # (T, F) f32

    # ---- LayerNorm (single pass, clamped var) + ReLU ----
    m2 = jnp.mean(h2, axis=-1, keepdims=True)
    v2 = jnp.maximum(jnp.mean(h2 * h2, axis=-1, keepdims=True) - m2 * m2, 0.0)
    h2 = (h2 - m2) * jax.lax.rsqrt(v2 + LN_EPS) * g2 + be2
    h2 = jnp.maximum(h2, 0.0)

    # ---- Linear(F -> 1) + ReLU as VPU multiply + lane reduce ----
    o = jnp.sum(h2.reshape(1, T, F) * wl.reshape(1, 1, F), axis=-1) + bl   # (1, T)
    out_ref[...] = jnp.maximum(o, 0.0).reshape(1, 1, T)


def _pack_small_params(params):
    """Coalesce the 8 small per-layer vectors into one (8, F) f32 block."""
    F = params["w1"].shape[-1]
    wl_row = params["wl"].reshape(1, F)
    bl_row = jnp.concatenate(
        [params["bl"].reshape(1, 1), jnp.zeros((1, F - 1), jnp.float32)], axis=-1)
    return jnp.concatenate(
        [params["b1"], params["g1"], params["be1"],
         params["b2"], params["g2"], params["be2"], wl_row, bl_row],
        axis=0).astype(jnp.float32)


def energy_predictor_pallas(x, params):
    """x: (B, T, Cin) float32.  Returns (B, T) float32 (ReLU'd predictor output)."""
    B, T, Cin = x.shape
    F = params["w1"].shape[-1]

    w1 = params["w1"].astype(jnp.bfloat16)                       # (3, Cin, F) tap-major
    w2cat = params["w2"].reshape(3 * F, F).astype(jnp.bfloat16)  # (3F, F) tap-major rows
    vecs = _pack_small_params(params)

    # TODO(synk): for very long sequences an additional T-tile grid axis (with a
    # 1-row halo recompute) would bound per-step VMEM further; one sequence per
    # step is enough for typical TTS lengths.
    out = pl.pallas_call(
        _energy_predictor_kernel,
        out_shape=jax.ShapeDtypeStruct((B, 1, T), jnp.float32),
        grid_spec=pltpu.PrefetchScalarGridSpec(
            num_scalar_prefetch=0,
            grid=(B,),
            in_specs=[
                pl.BlockSpec((1, T, Cin), lambda b: (b, 0, 0)),      # per-batch block
                pl.BlockSpec((3, Cin, F), lambda b: (0, 0, 0)),      # resident weights
                pl.BlockSpec((3 * F, F), lambda b: (0, 0)),
                pl.BlockSpec((8, F), lambda b: (0, 0)),
            ],
            out_specs=pl.BlockSpec((1, 1, T), lambda b: (b, 0, 0)),
            scratch_shapes=[
                pltpu.VMEM((T + 2, Cin), jnp.bfloat16),   # conv1 zero-haloed taps
                pltpu.VMEM((T, 3 * F), jnp.bfloat16),     # conv2 fused im2col operand
            ],
        ),
        compiler_params=pltpu.CompilerParams(
            dimension_semantics=("parallel",),            # 2 TCs on v7x; no-op on v5e/v6e
            vmem_limit_bytes=32 * 1024 * 1024),
    )(x.astype(jnp.float32), w1, w2cat, vecs)
    return out.reshape(B, T)


def energy_forward(x, params, bins, embedding_table, alpha_e=1.0):
    """Mirrors Energy.forward(x, alpha_e, target=None) with the module in eval mode."""
    pred = energy_predictor_pallas(x, params)                     # (B, T)

    # EnergyPredictor: out.squeeze(), then (eval mode) out.unsqueeze(0).
    pred = jnp.squeeze(pred)[None, ...]                           # (1, B, T)

    # ((out + 0.5) * alpha_e).int()  -> truncation toward zero
    pred_int = ((pred + 0.5) * alpha_e).astype(jnp.int32)

    # torch.bucketize(v, bins, right=False) == searchsorted(bins, v, side='left')
    quantized = jnp.searchsorted(bins, pred_int.astype(bins.dtype), side="left")

    # nn.Embedding lookup (plain gather outside the kernel).
    emb = embedding_table[quantized]                              # (1, B, T, encoder_dim)
    return emb, pred_int


def _energy_predictor_ref(x, params):
    """Pure-JAX f32 reference of EnergyPredictor (eval mode) for validation."""
    T = x.shape[1]
    xpad = jnp.pad(x, ((0, 0), (1, 1), (0, 0)))
    w1 = params["w1"]
    h = (jnp.einsum("btc,cf->btf", xpad[:, 0:T], w1[0])
         + jnp.einsum("btc,cf->btf", xpad[:, 1:T + 1], w1[1])
         + jnp.einsum("btc,cf->btf", xpad[:, 2:T + 2], w1[2]) + params["b1"])
    m = jnp.mean(h, -1, keepdims=True)
    v = jnp.mean((h - m) ** 2, -1, keepdims=True)
    h = jax.nn.relu((h - m) / jnp.sqrt(v + LN_EPS) * params["g1"] + params["be1"])

    hp = jnp.pad(h, ((0, 0), (1, 1), (0, 0)))
    w2 = params["w2"]
    h2 = (jnp.einsum("btc,cf->btf", hp[:, 0:T], w2[0])
          + jnp.einsum("btc,cf->btf", hp[:, 1:T + 1], w2[1])
          + jnp.einsum("btc,cf->btf", hp[:, 2:T + 2], w2[2]) + params["b2"])
    m2 = jnp.mean(h2, -1, keepdims=True)
    v2 = jnp.mean((h2 - m2) ** 2, -1, keepdims=True)
    h2 = jax.nn.relu((h2 - m2) / jnp.sqrt(v2 + LN_EPS) * params["g2"] + params["be2"])

    o = jnp.einsum("btf,fo->bto", h2, params["wl"]) + params["bl"]
    return jax.nn.relu(o)[..., 0]


def make_params(key, encoder_dim, filter_size):
    ks = jax.random.split(key, 8)
    s1 = 1.0 / jnp.sqrt(encoder_dim * 3.0)
    s2 = 1.0 / jnp.sqrt(filter_size * 3.0)
    sl = 1.0 / jnp.sqrt(float(filter_size))
    params = {
        # conv weights stored tap-major: (k, Cin, Cout)
        "w1": jax.random.uniform(ks[0], (3, encoder_dim, filter_size), jnp.float32, -s1, s1),
        "b1": jax.random.uniform(ks[1], (1, filter_size), jnp.float32, -s1, s1),
        "g1": jnp.ones((1, filter_size), jnp.float32),
        "be1": jnp.zeros((1, filter_size), jnp.float32),
        "w2": jax.random.uniform(ks[2], (3, filter_size, filter_size), jnp.float32, -s2, s2),
        "b2": jax.random.uniform(ks[3], (1, filter_size), jnp.float32, -s2, s2),
        "g2": jnp.ones((1, filter_size), jnp.float32),
        "be2": jnp.zeros((1, filter_size), jnp.float32),
        "wl": jax.random.uniform(ks[4], (filter_size, 1), jnp.float32, -sl, sl),
        "bl": jax.random.uniform(ks[5], (1, 1), jnp.float32, -sl, sl),
    }
    # nn.Embedding(duration_predictor_filter_size, encoder_dim), N(0, 1) init.
    embedding_table = jax.random.normal(ks[6], (filter_size, encoder_dim), jnp.float32)
    return params, embedding_table


if __name__ == "__main__":
    # Small config consistent with the module.  filter_size is 256 so the
    # nn.Embedding row count matches the 256 bucketize bins (a mismatched size
    # would make torch raise on out-of-range indices while JAX clamps silently).
    encoder_dim = 64
    filter_size = 256          # duration_predictor_filter_size (== number of bins)
    B, T = 2, 16

    key = jax.random.PRNGKey(0)
    k_x, k_p = jax.random.split(key)

    x = jax.random.normal(k_x, (B, T, encoder_dim), jnp.float32)
    params, embedding_table = make_params(k_p, encoder_dim, filter_size)

    # TODO(synk): original code loads energy_min/energy_max from .npy files; synthesized here.
    energy_min, energy_max = 0.0, 100.0
    bins = jnp.linspace(energy_min - 0.001, energy_max + 0.001, num=256, dtype=jnp.float32)

    # --- validate the Pallas predictor against a pure-JAX f32 reference ---
    pred_pallas = jax.jit(energy_predictor_pallas)(x, params)
    pred_ref = _energy_predictor_ref(x, params)
    jax.block_until_ready((pred_pallas, pred_ref))
    assert pred_pallas.shape == (B, T), pred_pallas.shape
    max_err = float(jnp.max(jnp.abs(pred_pallas - pred_ref)))
    # bf16 MXU operands (intentional) vs f32 reference -> loose tolerance.
    assert max_err < 2e-1, f"kernel vs reference max abs err {max_err}"

    # --- full Energy.forward (eval path, target=None) ---
    fwd = jax.jit(functools.partial(energy_forward, alpha_e=1.0))
    emb, pred_int = fwd(x, params, bins, embedding_table)
    jax.block_until_ready((emb, pred_int))

    assert emb.shape == (1, B, T, encoder_dim), emb.shape
    assert pred_int.shape == (1, B, T), pred_int.shape
    assert pred_int.dtype == jnp.int32
    print("KERNEL_OK")
</pallas_src>

<mosaic_0001>
module attributes {stable_mosaic.version = 11 : i64} {
  func.func @_energy_predictor_kernel(%arg0: i32, %arg1: memref<1x16x64xf32, #tpu.memory_space<vmem>>, %arg2: memref<3x64x256xbf16, #tpu.memory_space<vmem>>, %arg3: memref<768x256xbf16, #tpu.memory_space<vmem>>, %arg4: memref<8x256xf32, #tpu.memory_space<vmem>>, %arg5: memref<1x1x16xf32, #tpu.memory_space<vmem>>, %arg6: memref<18x64xbf16, #tpu.memory_space<vmem>>, %arg7: memref<16x768xbf16, #tpu.memory_space<vmem>>) attributes {dimension_semantics = [#tpu.dimension_semantics<parallel>], iteration_bounds = array<i64: 2>, scalar_prefetch = 0 : i64, scratch_operands = 2 : i64, tpu.core_type = #tpu.core_type<tc>, window_params = [{transform_indices = @transform_0, window_bounds = array<i64: 1, 16, 64>}, {pipeline_mode = #tpu.pipeline_mode<synchronous>, transform_indices = @transform_1, window_bounds = array<i64: 3, 64, 256>}, {pipeline_mode = #tpu.pipeline_mode<synchronous>, transform_indices = @transform_2, window_bounds = array<i64: 768, 256>}, {pipeline_mode = #tpu.pipeline_mode<synchronous>, transform_indices = @transform_3, window_bounds = array<i64: 8, 256>}, {transform_indices = @transform_4, window_bounds = array<i64: 1, 1, 16>}]} {
    %c0 = arith.constant 0 : index
    %c0_0 = arith.constant 0 : index
    %0 = vector.load %arg4[%c0, %c0_0] : memref<8x256xf32, #tpu.memory_space<vmem>>, vector<1x256xf32>
    %c1 = arith.constant 1 : index
    %c0_1 = arith.constant 0 : index
    %1 = vector.load %arg4[%c1, %c0_1] : memref<8x256xf32, #tpu.memory_space<vmem>>, vector<1x256xf32>
    %c2 = arith.constant 2 : index
    %c0_2 = arith.constant 0 : index
    %2 = vector.load %arg4[%c2, %c0_2] : memref<8x256xf32, #tpu.memory_space<vmem>>, vector<1x256xf32>
    %c3 = arith.constant 3 : index
    %c0_3 = arith.constant 0 : index
    %3 = vector.load %arg4[%c3, %c0_3] : memref<8x256xf32, #tpu.memory_space<vmem>>, vector<1x256xf32>
    %c4 = arith.constant 4 : index
    %c0_4 = arith.constant 0 : index
    %4 = vector.load %arg4[%c4, %c0_4] : memref<8x256xf32, #tpu.memory_space<vmem>>, vector<1x256xf32>
    %c5 = arith.constant 5 : index
    %c0_5 = arith.constant 0 : index
    %5 = vector.load %arg4[%c5, %c0_5] : memref<8x256xf32, #tpu.memory_space<vmem>>, vector<1x256xf32>
    %c6 = arith.constant 6 : index
    %c0_6 = arith.constant 0 : index
    %6 = vector.load %arg4[%c6, %c0_6] : memref<8x256xf32, #tpu.memory_space<vmem>>, vector<1x256xf32>
    %c7 = arith.constant 7 : index
    %c0_7 = arith.constant 0 : index
    %7 = vector.load %arg4[%c7, %c0_7] : memref<8x256xf32, #tpu.memory_space<vmem>>, vector<1x1xf32>
    %cst = arith.constant 0.000000e+00 : bf16
    %8 = vector.broadcast %cst : bf16 to vector<1x64xbf16>
    %c0_8 = arith.constant 0 : index
    %c0_9 = arith.constant 0 : index
    %9 = vector.load %arg6[%c0_8, %c0_9] : memref<18x64xbf16, #tpu.memory_space<vmem>>, vector<1x64xbf16>
    tpu.vector_store %arg6[%c0_8, %c0_9], %8 {strides = array<i32>} : memref<18x64xbf16, #tpu.memory_space<vmem>>, vector<1x64xbf16>,
    %cst_10 = arith.constant 0.000000e+00 : bf16
    %10 = vector.broadcast %cst_10 : bf16 to vector<1x64xbf16>
    %c17 = arith.constant 17 : index
    %c0_11 = arith.constant 0 : index
    %11 = vector.load %arg6[%c17, %c0_11] : memref<18x64xbf16, #tpu.memory_space<vmem>>, vector<1x64xbf16>
    tpu.vector_store %arg6[%c17, %c0_11], %10 {strides = array<i32>} : memref<18x64xbf16, #tpu.memory_space<vmem>>, vector<1x64xbf16>,
    %c0_12 = arith.constant 0 : index
    %c0_13 = arith.constant 0 : index
    %c0_14 = arith.constant 0 : index
    %12 = vector.load %arg1[%c0_12, %c0_13, %c0_14] : memref<1x16x64xf32, #tpu.memory_space<vmem>>, vector<1x16x64xf32>
    %13 = vector.shape_cast %12 : vector<1x16x64xf32> to vector<16x64xf32>
    %14 = arith.truncf %13 : vector<16x64xf32> to vector<16x64xbf16>
    %c1_15 = arith.constant 1 : index
    %c0_16 = arith.constant 0 : index
    %15 = vector.load %arg6[%c1_15, %c0_16] : memref<18x64xbf16, #tpu.memory_space<vmem>>, vector<16x64xbf16>
    tpu.vector_store %arg6[%c1_15, %c0_16], %14 {strides = array<i32>} : memref<18x64xbf16, #tpu.memory_space<vmem>>, vector<16x64xbf16>,
    %c0_17 = arith.constant 0 : index
    %c0_18 = arith.constant 0 : index
    %16 = vector.load %arg6[%c0_17, %c0_18] : memref<18x64xbf16, #tpu.memory_space<vmem>>, vector<16x64xbf16>
    %c0_19 = arith.constant 0 : index
    %c0_20 = arith.constant 0 : index
    %c0_21 = arith.constant 0 : index
    %17 = vector.load %arg2[%c0_19, %c0_20, %c0_21] : memref<3x64x256xbf16, #tpu.memory_space<vmem>>, vector<1x64x256xbf16>
    %18 = vector.shape_cast %17 : vector<1x64x256xbf16> to vector<64x256xbf16>
    %cst_22 = arith.constant dense<0.000000e+00> : vector<16x256xf32>
    %19 = tpu.matmul %16, %18, %cst_22 {dimension_numbers = #tpu.dot_dimension_numbers<[1], [0], [0], [1], [0, 0, 1, 1], [], []>} : vector<16x64xbf16>, vector<64x256xbf16>, vector<16x256xf32> -> vector<16x256xf32>
    %c1_23 = arith.constant 1 : index
    %c0_24 = arith.constant 0 : index
    %20 = vector.load %arg6[%c1_23, %c0_24] : memref<18x64xbf16, #tpu.memory_space<vmem>>, vector<16x64xbf16>
    %c1_25 = arith.constant 1 : index
    %c0_26 = arith.constant 0 : index
    %c0_27 = arith.constant 0 : index
    %21 = vector.load %arg2[%c1_25, %c0_26, %c0_27] : memref<3x64x256xbf16, #tpu.memory_space<vmem>>, vector<1x64x256xbf16>
    %22 = vector.shape_cast %21 : vector<1x64x256xbf16> to vector<64x256xbf16>
    %cst_28 = arith.constant dense<0.000000e+00> : vector<16x256xf32>
    %23 = tpu.matmul %20, %22, %cst_28 {dimension_numbers = #tpu.dot_dimension_numbers<[1], [0], [0], [1], [0, 0, 1, 1], [], []>} : vector<16x64xbf16>, vector<64x256xbf16>, vector<16x256xf32> -> vector<16x256xf32>
    %24 = arith.addf %19, %23 : vector<16x256xf32>
    %c2_29 = arith.constant 2 : index
    %c0_30 = arith.constant 0 : index
    %25 = vector.load %arg6[%c2_29, %c0_30] : memref<18x64xbf16, #tpu.memory_space<vmem>>, vector<16x64xbf16>
    %c2_31 = arith.constant 2 : index
    %c0_32 = arith.constant 0 : index
    %c0_33 = arith.constant 0 : index
    %26 = vector.load %arg2[%c2_31, %c0_32, %c0_33] : memref<3x64x256xbf16, #tpu.memory_space<vmem>>, vector<1x64x256xbf16>
    %27 = vector.shape_cast %26 : vector<1x64x256xbf16> to vector<64x256xbf16>
    %cst_34 = arith.constant dense<0.000000e+00> : vector<16x256xf32>
    %28 = tpu.matmul %25, %27, %cst_34 {dimension_numbers = #tpu.dot_dimension_numbers<[1], [0], [0], [1], [0, 0, 1, 1], [], []>} : vector<16x64xbf16>, vector<64x256xbf16>, vector<16x256xf32> -> vector<16x256xf32>
    %29 = arith.addf %24, %28 : vector<16x256xf32>
    %30 = vector.broadcast %0 : vector<1x256xf32> to vector<16x256xf32>
    %31 = arith.addf %29, %30 : vector<16x256xf32>
    %cst_35 = arith.constant dense<0.000000e+00> : vector<16xf32>
    %32 = vector.multi_reduction <add>, %31, %cst_35 [1] : vector<16x256xf32> to vector<16xf32>
    %33 = vector.shape_cast %32 : vector<16xf32> to vector<16x1xf32>
    %cst_36 = arith.constant 2.560000e+02 : f32
    %34 = vector.broadcast %cst_36 : f32 to vector<16x1xf32>
    %35 = arith.divf %33, %34 : vector<16x1xf32>
    %36 = arith.mulf %31, %31 : vector<16x256xf32>
    %cst_37 = arith.constant dense<0.000000e+00> : vector<16xf32>
    %37 = vector.multi_reduction <add>, %36, %cst_37 [1] : vector<16x256xf32> to vector<16xf32>
    %38 = vector.shape_cast %37 : vector<16xf32> to vector<16x1xf32>
    %cst_38 = arith.constant 2.560000e+02 : f32
    %39 = vector.broadcast %cst_38 : f32 to vector<16x1xf32>
    %40 = arith.divf %38, %39 : vector<16x1xf32>
    %41 = arith.mulf %35, %35 : vector<16x1xf32>
    %42 = arith.subf %40, %41 : vector<16x1xf32>
    %cst_39 = arith.constant 0.000000e+00 : f32
    %43 = vector.broadcast %cst_39 : f32 to vector<16x1xf32>
    %44 = arith.maximumf %42, %43 : vector<16x1xf32>
    %45 = vector.broadcast %35 : vector<16x1xf32> to vector<16x256xf32>
    %46 = arith.subf %31, %45 : vector<16x256xf32>
    %cst_40 = arith.constant 9.99999974E-6 : f32
    %47 = vector.broadcast %cst_40 : f32 to vector<16x1xf32>
    %48 = arith.addf %44, %47 : vector<16x1xf32>
    %49 = math.rsqrt %48 : vector<16x1xf32>
    %50 = vector.broadcast %49 : vector<16x1xf32> to vector<16x256xf32>
    %51 = arith.mulf %46, %50 : vector<16x256xf32>
    %52 = vector.broadcast %1 : vector<1x256xf32> to vector<16x256xf32>
    %53 = arith.mulf %51, %52 : vector<16x256xf32>
    %54 = vector.broadcast %2 : vector<1x256xf32> to vector<16x256xf32>
    %55 = arith.addf %53, %54 : vector<16x256xf32>
    %cst_41 = arith.constant 0.000000e+00 : f32
    %56 = vector.broadcast %cst_41 : f32 to vector<16x256xf32>
    %57 = arith.maximumf %55, %56 : vector<16x256xf32>
    %58 = arith.truncf %57 : vector<16x256xf32> to vector<16x256xbf16>
    %c0_42 = arith.constant 0 : index
    %c256 = arith.constant 256 : index
    %59 = vector.load %arg7[%c0_42, %c256] : memref<16x768xbf16, #tpu.memory_space<vmem>>, vector<16x256xbf16>
    tpu.vector_store %arg7[%c0_42, %c256], %58 {strides = array<i32>} : memref<16x768xbf16, #tpu.memory_space<vmem>>, vector<16x256xbf16>,
    %cst_43 = arith.constant 0.000000e+00 : bf16
    %60 = vector.broadcast %cst_43 : bf16 to vector<1x256xbf16>
    %c0_44 = arith.constant 0 : index
    %c0_45 = arith.constant 0 : index
    %61 = vector.load %arg7[%c0_44, %c0_45] : memref<16x768xbf16, #tpu.memory_space<vmem>>, vector<1x256xbf16>
    tpu.vector_store %arg7[%c0_44, %c0_45], %60 {strides = array<i32>} : memref<16x768xbf16, #tpu.memory_space<vmem>>, vector<1x256xbf16>,
    %62 = vector.extract_strided_slice %58 {offsets = [0, 0], sizes = [15, 256], strides = [1, 1]} : vector<16x256xbf16> to vector<15x256xbf16>
    %c1_46 = arith.constant 1 : index
    %c0_47 = arith.constant 0 : index
    %63 = vector.load %arg7[%c1_46, %c0_47] : memref<16x768xbf16, #tpu.memory_space<vmem>>, vector<15x256xbf16>
    tpu.vector_store %arg7[%c1_46, %c0_47], %62 {strides = array<i32>} : memref<16x768xbf16, #tpu.memory_space<vmem>>, vector<15x256xbf16>,
    %64 = vector.extract_strided_slice %58 {offsets = [1, 0], sizes = [15, 256], strides = [1, 1]} : vector<16x256xbf16> to vector<15x256xbf16>
    %c0_48 = arith.constant 0 : index
    %c512 = arith.constant 512 : index
    %65 = vector.load %arg7[%c0_48, %c512] : memref<16x768xbf16, #tpu.memory_space<vmem>>, vector<15x256xbf16>
    tpu.vector_store %arg7[%c0_48, %c512], %64 {strides = array<i32>} : memref<16x768xbf16, #tpu.memory_space<vmem>>, vector<15x256xbf16>,
    %cst_49 = arith.constant 0.000000e+00 : bf16
    %66 = vector.broadcast %cst_49 : bf16 to vector<1x256xbf16>
    %c15 = arith.constant 15 : index
    %c512_50 = arith.constant 512 : index
    %67 = vector.load %arg7[%c15, %c512_50] : memref<16x768xbf16, #tpu.memory_space<vmem>>, vector<1x256xbf16>
    tpu.vector_store %arg7[%c15, %c512_50], %66 {strides = array<i32>} : memref<16x768xbf16, #tpu.memory_space<vmem>>, vector<1x256xbf16>,
    %c0_51 = arith.constant 0 : index
    %c0_52 = arith.constant 0 : index
    %68 = vector.load %arg7[%c0_51, %c0_52] : memref<16x768xbf16, #tpu.memory_space<vmem>>, vector<16x768xbf16>
    %c0_53 = arith.constant 0 : index
    %c0_54 = arith.constant 0 : index
    %69 = vector.load %arg3[%c0_53, %c0_54] : memref<768x256xbf16, #tpu.memory_space<vmem>>, vector<768x256xbf16>
    %cst_55 = arith.constant dense<0.000000e+00> : vector<16x256xf32>
    %70 = tpu.matmul %68, %69, %cst_55 {dimension_numbers = #tpu.dot_dimension_numbers<[1], [0], [0], [1], [0, 0, 1, 1], [], []>} : vector<16x768xbf16>, vector<768x256xbf16>, vector<16x256xf32> -> vector<16x256xf32>
    %71 = vector.broadcast %3 : vector<1x256xf32> to vector<16x256xf32>
    %72 = arith.addf %70, %71 : vector<16x256xf32>
    %cst_56 = arith.constant dense<0.000000e+00> : vector<16xf32>
    %73 = vector.multi_reduction <add>, %72, %cst_56 [1] : vector<16x256xf32> to vector<16xf32>
    %74 = vector.shape_cast %73 : vector<16xf32> to vector<16x1xf32>
    %cst_57 = arith.constant 2.560000e+02 : f32
    %75 = vector.broadcast %cst_57 : f32 to vector<16x1xf32>
    %76 = arith.divf %74, %75 : vector<16x1xf32>
    %77 = arith.mulf %72, %72 : vector<16x256xf32>
    %cst_58 = arith.constant dense<0.000000e+00> : vector<16xf32>
    %78 = vector.multi_reduction <add>, %77, %cst_58 [1] : vector<16x256xf32> to vector<16xf32>
    %79 = vector.shape_cast %78 : vector<16xf32> to vector<16x1xf32>
    %cst_59 = arith.constant 2.560000e+02 : f32
    %80 = vector.broadcast %cst_59 : f32 to vector<16x1xf32>
    %81 = arith.divf %79, %80 : vector<16x1xf32>
    %82 = arith.mulf %76, %76 : vector<16x1xf32>
    %83 = arith.subf %81, %82 : vector<16x1xf32>
    %cst_60 = arith.constant 0.000000e+00 : f32
    %84 = vector.broadcast %cst_60 : f32 to vector<16x1xf32>
    %85 = arith.maximumf %83, %84 : vector<16x1xf32>
    %86 = vector.broadcast %76 : vector<16x1xf32> to vector<16x256xf32>
    %87 = arith.subf %72, %86 : vector<16x256xf32>
    %cst_61 = arith.constant 9.99999974E-6 : f32
    %88 = vector.broadcast %cst_61 : f32 to vector<16x1xf32>
    %89 = arith.addf %85, %88 : vector<16x1xf32>
    %90 = math.rsqrt %89 : vector<16x1xf32>
    %91 = vector.broadcast %90 : vector<16x1xf32> to vector<16x256xf32>
    %92 = arith.mulf %87, %91 : vector<16x256xf32>
    %93 = vector.broadcast %4 : vector<1x256xf32> to vector<16x256xf32>
    %94 = arith.mulf %92, %93 : vector<16x256xf32>
    %95 = vector.broadcast %5 : vector<1x256xf32> to vector<16x256xf32>
    %96 = arith.addf %94, %95 : vector<16x256xf32>
    %cst_62 = arith.constant 0.000000e+00 : f32
    %97 = vector.broadcast %cst_62 : f32 to vector<16x256xf32>
    %98 = arith.maximumf %96, %97 : vector<16x256xf32>
    %99 = vector.shape_cast %98 : vector<16x256xf32> to vector<1x16x256xf32>
    %100 = vector.shape_cast %6 : vector<1x256xf32> to vector<1x1x256xf32>
    %101 = vector.broadcast %100 : vector<1x1x256xf32> to vector<1x16x256xf32>
    %102 = arith.mulf %99, %101 : vector<1x16x256xf32>
    %cst_63 = arith.constant dense<0.000000e+00> : vector<1x16xf32>
    %103 = vector.multi_reduction <add>, %102, %cst_63 [2] : vector<1x16x256xf32> to vector<1x16xf32>
    %104 = vector.broadcast %7 : vector<1x1xf32> to vector<1x16xf32>
    %105 = arith.addf %103, %104 : vector<1x16xf32>
    %cst_64 = arith.constant 0.000000e+00 : f32
    %106 = vector.broadcast %cst_64 : f32 to vector<1x16xf32>
    %107 = arith.maximumf %105, %106 : vector<1x16xf32>
    %108 = vector.shape_cast %107 : vector<1x16xf32> to vector<1x1x16xf32>
    %c0_65 = arith.constant 0 : index
    %c0_66 = arith.constant 0 : index
    %c0_67 = arith.constant 0 : index
    %109 = vector.load %arg5[%c0_65, %c0_66, %c0_67] : memref<1x1x16xf32, #tpu.memory_space<vmem>>, vector<1x1x16xf32>
    tpu.vector_store %arg5[%c0_65, %c0_66, %c0_67], %108 {strides = array<i32>} : memref<1x1x16xf32, #tpu.memory_space<vmem>>, vector<1x1x16xf32>,
    return
  }
  func.func @transform_0(%arg0: i32) -> (i32, i32, i32) {
    %c0_i32 = arith.constant 0 : i32
    %c0_i32_0 = arith.constant 0 : i32
    %c0_i32_1 = arith.constant 0 : i32
    return %arg0, %c0_i32, %c0_i32_0 : i32, i32, i32
  }
  func.func @transform_1(%arg0: i32) -> (i32, i32, i32) {
    %c0_i32 = arith.constant 0 : i32
    %c0_i32_0 = arith.constant 0 : i32
    %c0_i32_1 = arith.constant 0 : i32
    %c0_i32_2 = arith.constant 0 : i32
    return %c0_i32, %c0_i32_0, %c0_i32_1 : i32, i32, i32
  }
  func.func @transform_2(%arg0: i32) -> (i32, i32) {
    %c0_i32 = arith.constant 0 : i32
    %c0_i32_0 = arith.constant 0 : i32
    %c0_i32_1 = arith.constant 0 : i32
    return %c0_i32, %c0_i32_0 : i32, i32
  }
  func.func @transform_3(%arg0: i32) -> (i32, i32) {
    %c0_i32 = arith.constant 0 : i32
    %c0_i32_0 = arith.constant 0 : i32
    %c0_i32_1 = arith.constant 0 : i32
    return %c0_i32, %c0_i32_0 : i32, i32
  }
  func.func @transform_4(%arg0: i32) -> (i32, i32, i32) {
    %c0_i32 = arith.constant 0 : i32
    %c0_i32_0 = arith.constant 0 : i32
    %c0_i32_1 = arith.constant 0 : i32
    return %arg0, %c0_i32, %c0_i32_0 : i32, i32, i32
  }
}

</mosaic_0001>

<llo_original>
// kernel: energy_predictor_pallas.1
$region0: #{energy_predictor_pallas.1}
  #allocation0 [shape = 'u32[]', space=smem, size = 0x4, offset = 0x4, fixed_abs, tag = 'smem constant byte address 0x4 - core index']
  #allocation1 [shape = 'u32[144,128]{1,0:T(1,128)}', space=vmem, size = 0x12000, scoped, tag = 'internal scratch']
  #allocation2 [shape = 'bf16[18,64]{1,0:T(8,128)(2,1)}', space=vmem, size = 0x1800, scoped, tag = 'scratch operand']
  #allocation3 [shape = 'bf16[16,768]{1,0:T(16,128)(2,1)}', space=vmem, size = 0x6000, scoped, tag = 'scratch operand']
  %s0 = inlined_call_operand.vmem [shape: f32[2,16,64], index: 0, kind: input, shape index: {}]
  %s1 = inlined_call_operand.vmem [shape: bf16[3,64,256], index: 1, kind: input, shape index: {}]
  %s2 = inlined_call_operand.vmem [shape: bf16[768,256], index: 2, kind: input, shape index: {}]
  %s3 = inlined_call_operand.vmem [shape: f32[8,256], index: 3, kind: input, shape index: {}]
  %s4 = inlined_call_operand.hbm [shape: f32[2,1,16], index: 4, kind: output, shape index: {}]
  %s5 = sld [smem:[#allocation0]]
  $region49: #{energy_predictor_pallas.1} parent=0
    _
  %s7 = ssub.s32 1, %s5
  %s8 = scalar_select 0, %s7, %s5
  $region1: #{energy_predictor_pallas.1} parent=0
    #allocation4 [shape = 'u8[1024]{0}', space=vmem, size = 0x400, scoped, tag = 'output window, operand 0']
    #allocation5 [shape = 's32[2]{0}', space=sflag, size = 0x8, scoped, tag = 'scoped memory for energy_predictor_pallas.1']
    %9 = vsyncpa [#allocation5], 0
    %s10 = scalar_lea.sflag [#allocation5], 1
    %11 = vsyncpa %s10, 0
    loop: start=0, step=1, limit=4
    $region2: #{energy_predictor_pallas.1} parent=1 // loop_pre_header
      _
    $region3: #{energy_predictor_pallas.1} parent=1 // loop_header
      %s13 = sphi 0, %s17
      %p14 = scmp.ge.s32.totalorder %s13, 4
      %s23 = sphi 0, %s25
      %s26 = sphi 0, %s23
      %s27 = sphi 0, %s26
      %s43 = sphi 0, %s27
      %s47 = sphi 0, %s47
      %s49 = sphi 0, %s47
      %s50 = sphi 0, %s49
      %s64 = sphi 0, %s50
      %s68 = sphi 0, %s68
      %s70 = sphi 0, %s68
      %s71 = sphi 0, %s70
      %s85 = sphi 0, %s71
      %s89 = sphi 0, %s89
      %s91 = sphi 0, %s89
      %s92 = sphi 0, %s91
      %s106 = sphi 0, %s92
      %s112 = sphi 0, %s114
      %s115 = sphi 0, %s112
      %s116 = sphi 0, %s115
      %s132 = sphi 0, %s116
    $region4: #{energy_predictor_pallas.1} parent=1 // loop_header_branch
      %16 = sbr.rel (%p14) target = $region8
    $region5: #{energy_predictor_pallas.1} parent=1 // loop_body
      %s18 = ssub.s32 %s13, 1
      %s19 = ssub.s32 %s13, 2
      %s20 = sadd.s32 %s13, 1
      %s21 = ssub.s32 %s13, %s20
      %p22 = scmp.eq.s32.totalorder %s21, 0
      %s24 = sadd.s32 %s23, 1
      %s25 = scalar_select %p22, %s23, %s24
      %p28 = pneg %p22
      %p29 = scmp.eq.s32.totalorder %s13, 1
      %p30 = por %p28, %p29
      %p31 = scmp.ne.s32.totalorder %s23, %s26
      %p32 = scmp.eq.s32.totalorder %s13, 0
      %p33 = por %p31, %p32
      %p34 = scmp.ne.s32.totalorder %s23, %s26
      %p35 = scmp.eq.s32.totalorder %s18, 1
      %p36 = por %p34, %p35
      %p37 = scmp.ne.s32.totalorder %s26, %s27
      %p38 = scmp.eq.s32.totalorder %s18, 0
      %p39 = por %p37, %p38
      %p40 = scmp.ne.s32.totalorder %s26, %s27
      %p41 = scmp.eq.s32.totalorder %s19, 1
      %p42 = por %p40, %p41
      %p44 = scmp.ne.s32.totalorder %s27, %s43
      %p45 = scmp.eq.s32.totalorder %s19, 0
      %p46 = por %p44, %p45
      %s48 = sadd.s32 %s47, 1
      %p51 = scmp.eq.s32.totalorder %s13, 1
      %p52 = scmp.ne.s32.totalorder %s47, %s49
      %p53 = scmp.eq.s32.totalorder %s13, 0
      %p54 = por %p52, %p53
      %p55 = scmp.ne.s32.totalorder %s47, %s49
      %p56 = scmp.eq.s32.totalorder %s18, 1
      %p57 = por %p55, %p56
      %p58 = scmp.ne.s32.totalorder %s49, %s50
      %p59 = scmp.eq.s32.totalorder %s18, 0
      %p60 = por %p58, %p59
      %p61 = scmp.ne.s32.totalorder %s49, %s50
      %p62 = scmp.eq.s32.totalorder %s19, 1
      %p63 = por %p61, %p62
      %p65 = scmp.ne.s32.totalorder %s50, %s64
      %p66 = scmp.eq.s32.totalorder %s19, 0
      %p67 = por %p65, %p66
      %s69 = sadd.s32 %s68, 1
      %p72 = scmp.eq.s32.totalorder %s13, 1
      %p73 = scmp.ne.s32.totalorder %s68, %s70
      %p74 = scmp.eq.s32.totalorder %s13, 0
      %p75 = por %p73, %p74
      %p76 = scmp.ne.s32.totalorder %s68, %s70
      %p77 = scmp.eq.s32.totalorder %s18, 1
      %p78 = por %p76, %p77
      %p79 = scmp.ne.s32.totalorder %s70, %s71
      %p80 = scmp.eq.s32.totalorder %s18, 0
      %p81 = por %p79, %p80
      %p82 = scmp.ne.s32.totalorder %s70, %s71
      %p83 = scmp.eq.s32.totalorder %s19, 1
      %p84 = por %p82, %p83
      %p86 = scmp.ne.s32.totalorder %s71, %s85
      %p87 = scmp.eq.s32.totalorder %s19, 0
      %p88 = por %p86, %p87
      %s90 = sadd.s32 %s89, 1
      %p93 = scmp.eq.s32.totalorder %s13, 1
      %p94 = scmp.ne.s32.totalorder %s89, %s91
      %p95 = scmp.eq.s32.totalorder %s13, 0
      %p96 = por %p94, %p95
      %p97 = scmp.ne.s32.totalorder %s89, %s91
      %p98 = scmp.eq.s32.totalorder %s18, 1
      %p99 = por %p97, %p98
      %p100 = scmp.ne.s32.totalorder %s91, %s92
      %p101 = scmp.eq.s32.totalorder %s18, 0
      %p102 = por %p100, %p101
      %p103 = scmp.ne.s32.totalorder %s91, %s92
      %p104 = scmp.eq.s32.totalorder %s19, 1
      %p105 = por %p103, %p104
      %p107 = scmp.ne.s32.totalorder %s92, %s106
      %p108 = scmp.eq.s32.totalorder %s19, 0
      %p109 = por %p107, %p108
      %s110 = ssub.s32 %s13, %s20
      %p111 = scmp.eq.s32.totalorder %s110, 0
      %s113 = sadd.s32 %s112, 1
      %s114 = scalar_select %p111, %s112, %s113
      %p117 = pneg %p111
      %p118 = scmp.eq.s32.totalorder %s13, 1
      %p119 = por %p117, %p118
      %p120 = scmp.ne.s32.totalorder %s112, %s115
      %p121 = scmp.eq.s32.totalorder %s13, 0
      %p122 = por %p120, %p121
      %p123 = scmp.ne.s32.totalorder %s112, %s115
      %p124 = scmp.eq.s32.totalorder %s18, 1
      %p125 = por %p123, %p124
      %p126 = scmp.ne.s32.totalorder %s115, %s116
      %p127 = scmp.eq.s32.totalorder %s18, 0
      %p128 = por %p126, %p127
      %p129 = scmp.ne.s32.totalorder %s115, %s116
      %p130 = scmp.eq.s32.totalorder %s19, 1
      %p131 = por %p129, %p130
      %p133 = scmp.ne.s32.totalorder %s116, %s132
      %p134 = scmp.eq.s32.totalorder %s19, 0
      %p135 = por %p133, %p134
      %p136 = scmp.le.s32.totalorder 1, %s13
      %p137 = scmp.lt.s32.totalorder %s13, 3
      %p138 = pnand %p136, %p137
      %p139 = pneg %p138
      // Predicated region
      $region9: #{energy_predictor_pallas.1} parent=5 // pred_check
        _
      $region10: #{energy_predictor_pallas.1} parent=5 // pred_check_branch
        %141 = sbr.rel (%p138) target = $region12
      $region11: #{energy_predictor_pallas.1} parent=5 // pred_region
        %s142 = ssub.s32 %s13, 1
        // Predicated region
        $region13: #{energy_predictor_pallas.1} parent=11 // pred_check
          %p143 = pneg %p60
        $region14: #{energy_predictor_pallas.1} parent=11 // pred_check_branch
          %145 = sbr.rel (%p143) target = $region16
        $region15: #{energy_predictor_pallas.1} parent=11 // pred_region
          _
        $region16: #{energy_predictor_pallas.1} parent=11 // pred_fallthru
          _
        // Predicated region
        $region17: #{energy_predictor_pallas.1} parent=11 // pred_check
          %p146 = pneg %p81
        $region18: #{energy_predictor_pallas.1} parent=11 // pred_check_branch
          %148 = sbr.rel (%p146) target = $region20
        $region19: #{energy_predictor_pallas.1} parent=11 // pred_region
          _
        $region20: #{energy_predictor_pallas.1} parent=11 // pred_fallthru
          _
        // Predicated region
        $region21: #{energy_predictor_pallas.1} parent=11 // pred_check
          %p149 = pneg %p102
        $region22: #{energy_predictor_pallas.1} parent=11 // pred_check_branch
          %151 = sbr.rel (%p149) target = $region24
        $region23: #{energy_predictor_pallas.1} parent=11 // pred_region
          _
        $region24: #{energy_predictor_pallas.1} parent=11 // pred_fallthru
          _
      $region12: #{energy_predictor_pallas.1} parent=5 // pred_fallthru
        _
      %p152 = scmp.lt.s32.totalorder %s13, 2
      // Predicated region
      $region25: #{energy_predictor_pallas.1} parent=5 // pred_check
        %p153 = pneg %p152
      $region26: #{energy_predictor_pallas.1} parent=5 // pred_check_branch
        %155 = sbr.rel (%p153) target = $region28
      $region27: #{energy_predictor_pallas.1} parent=5 // pred_region
        // Predicated region
        $region29: #{energy_predictor_pallas.1} parent=27 // pred_check
          %p156 = pneg %p33
        $region30: #{energy_predictor_pallas.1} parent=27 // pred_check_branch
          %158 = sbr.rel (%p156) target = $region32
        $region31: #{energy_predictor_pallas.1} parent=27 // pred_region
          %p159 = scmp.lt.s32.totalorder %s13, 1
          %s160 = scalar_select %p159, %s13, 1
          %s161 = smul.addr %s160, 2
          %s162 = smul.addr %s161, 8
          %s163 = scalar_lea.vmem %s0, %s162
        $region32: #{energy_predictor_pallas.1} parent=27 // pred_fallthru
          _
      $region28: #{energy_predictor_pallas.1} parent=5 // pred_fallthru
        _
      %p164 = scmp.le.s32.totalorder 1, %s13
      %p165 = scmp.lt.s32.totalorder %s13, 3
      %p166 = pnand %p164, %p165
      %p167 = pneg %p166
      // Predicated region
      $region33: #{energy_predictor_pallas.1} parent=5 // pred_check
        _
      $region34: #{energy_predictor_pallas.1} parent=5 // pred_check_branch
        %169 = sbr.rel (%p166) target = $region36
      $region35: #{energy_predictor_pallas.1} parent=5 // pred_region
        %s170 = ssub.s32 %s13, 1
        %p171 = scmp.lt.s32.totalorder %s18, 1
        %s172 = scalar_select %p171, %s18, 1
        %s173 = smul.addr %s172, 2
        %s174 = smul.addr %s173, 8
        %s175 = scalar_lea.vmem %s0, %s174
        %p176 = pneg %p39
        %p177 = pneg %p36
        %p178 = pneg %p60
        %p179 = pneg %p57
        %p180 = pneg %p81
        %p181 = pneg %p78
        %p182 = pneg %p102
        %p183 = pneg %p99
        %p184 = pneg %p128
        %p185 = pneg %p125
        %s186 = sand.u32 %s115, 1
        %s187 = scalar_lea.sflag [#allocation5], %s186
        %s188 = sand.u32 %s115, 1
        %s189 = scalar_lea.vmem [#allocation4], %s188
        %p190 = scmp.lt.s32.totalorder %s18, 1
        %s191 = scalar_select %p190, %s18, 1
        %s192 = smul.addr %s191, 2
        %s193 = smul.addr %s192, 8
        %s194 = scalar_lea.vmem %s0, %s193
        %v196 = vld [vmem:[%s3] ss:$8 sm:$0x3]
        %s197 = scalar_lea.vmem %s3, 1
        %v198 = vld [vmem:[%s197] ss:$8 sm:$0x3]
        %s199 = scalar_lea.vmem %s3, 2
        %v200 = vld [vmem:[%s199] ss:$8 sm:$0x3]
        %s201 = scalar_lea.vmem %s3, 3
        %v202 = vld [vmem:[%s201] ss:$8 sm:$0x3]
        %s203 = scalar_lea.vmem %s3, 4
        %v204 = vld [vmem:[%s203] ss:$8 sm:$0x3]
        %s205 = scalar_lea.vmem %s3, 5
        %v206 = vld [vmem:[%s205] ss:$8 sm:$0x3]
        %s207 = scalar_lea.vmem %s3, 6
        %v208 = vld [vmem:[%s207] ss:$8 sm:$0x3]
        %v209 = vld [vmem:[%s3 + $0x7] ss:$0 sm:$0xff]
        %vm210 = vcmask 516096
        %vm211 = vsmask.f32 256
        %vm212 = vmand %vm210, %vm211
        %v213 = vld [vmem:[#allocation2] sm:$0x1]
        %v214 = vsel %vm212, 0, %v213
        %215 = vst [vmem:[#allocation2] sm:$0x1] %v214
        %vm216 = vsmask.f32 7938
        %vm217 = vmand %vm210, %vm216
        %v218 = vld [vmem:[#allocation2 + $0x8] sm:$0x1]
        %v219 = vsel %vm217, 0, %v218
        %220 = vst [vmem:[#allocation2 + $0x8] sm:$0x1] %v219
        %v221 = vld [vmem:[%s194] sm:$0xff]
        %v222 = vld [vmem:[%s194 + $0x8] sm:$0xff]
        %v223 = vpack.c.bf16 %v222, %v221
        %v225 = vunpack.c.l.b16 %v223
        %v226 = vunpack.c.h.b16 %v223
        %v227 = vpack.c.b16 %v225, %v225
        %v228 = vpack.c.b16 %v226, %v226
        %vm229 = vsmask.f32 4368
        %vm230 = vmor %vm211, %vm229
        %v232 = vshrl.u32 %v227, 16
        %v234 = vrot.slane %v232, 7
        %v235 = vshll.u32 %v227, 16
        %v237 = vor.u32 %v234, %v235
        %v238 = vrot.slane %v234, 4
        %v240 = vshrl.u32 %v228, 16
        %v242 = vrot.slane %v240, 7
        %v243 = vshll.u32 %v228, 16
        %v245 = vor.u32 %v242, %v243
        %v246 = vsel %vm230, %v238, %v245
        %v247 = vrot.slane %v242, 4
        %vm251 = vcmask 519168
        %vm252 = vmand %vm251, %vm216
        %v253 = vld [vmem:[#allocation2] sm:$0xf]
        %v254 = vsel %vm252, %v237, %v253
        %255 = vst [vmem:[#allocation2] sm:$0xf] %v254
        %vm256 = vcmask 519168
        %257 = vst.msk [vmem:[#allocation2 + $0x4] sm:$0xf] %vm256, %v246
        %v258 = vld [vmem:[#allocation2 + $0x8] sm:$0x1]
        %v259 = vsel %vm212, %v247, %v258
        %260 = vst [vmem:[#allocation2 + $0x8] sm:$0x1] %v259
        %v261 = vld [vmem:[#allocation2] sm:$0xf]
        %v262 = vld [vmem:[#allocation2 + $0x4] sm:$0xf]
        %v263 = vld [vmem:[%s1] sm:$0xff]
        %v264 = vld [vmem:[%s1 + $0x8] sm:$0xff]
        %v265 = vld [vmem:[%s1 + $0x10] sm:$0xff]
        %v266 = vld [vmem:[%s1 + $0x18] sm:$0xff]
        %v267 = vld [vmem:[%s1 + $0x20] sm:$0xff]
        %v268 = vld [vmem:[%s1 + $0x28] sm:$0xff]
        %v269 = vld [vmem:[%s1 + $0x30] sm:$0xff]
        %v270 = vld [vmem:[%s1 + $0x38] sm:$0xff]
        %v271 = vld [vmem:[#allocation2 + $0x8] sm:$0x1]
        %s272 = scalar_lea.vmem %s1, 64
        %v273 = vld [vmem:[%s272] sm:$0xff]
        %v274 = vld [vmem:[%s272 + $0x8] sm:$0xff]
        %v275 = vld [vmem:[%s272 + $0x10] sm:$0xff]
        %v276 = vld [vmem:[%s272 + $0x18] sm:$0xff]
        %v277 = vld [vmem:[%s272 + $0x20] sm:$0xff]
        %v278 = vld [vmem:[%s272 + $0x28] sm:$0xff]
        %v279 = vld [vmem:[%s272 + $0x30] sm:$0xff]
        %v280 = vld [vmem:[%s272 + $0x38] sm:$0xff]
        %v284 = vunpack.c.l.b16 %v261
        %v285 = vunpack.c.l.b16 %v262
        %v286 = vunpack.c.l.b16 %v271
        %v287 = vpack.c.b16 %v285, %v284
        %v288 = vpack.c.b16 %v286, %v286
        %vm289 = vsmask.f32 7424
        %v291 = vshrl.u32 %v287, 16
        %v293 = vshll.u32 %v287, 16
        %v295 = vrot.slane %v293, 1
        %v296 = vor.u32 %v291, %v295
        %v298 = vshll.u32 %v288, 16
        %v300 = vrot.slane %v298, 1
        %v301 = vsel %vm289, %v296, %v300
        %v310 = vunpack.c.l.b16 %v273
        %v311 = vunpack.c.h.b16 %v273
        %v312 = vunpack.c.l.b16 %v274
        %v313 = vunpack.c.h.b16 %v274
        %v314 = vunpack.c.l.b16 %v275
        %v315 = vunpack.c.h.b16 %v275
        %v316 = vunpack.c.l.b16 %v276
        %v317 = vunpack.c.h.b16 %v276
        %v318 = vunpack.c.l.b16 %v277
        %v319 = vunpack.c.h.b16 %v277
        %v320 = vunpack.c.l.b16 %v278
        %v321 = vunpack.c.h.b16 %v278
        %v322 = vunpack.c.l.b16 %v279
        %v323 = vunpack.c.h.b16 %v279
        %v324 = vunpack.c.l.b16 %v280
        %v325 = vunpack.c.h.b16 %v280
        %v326 = vpack.c.b16 %v312, %v310
        %v327 = vpack.c.b16 %v313, %v311
        %v328 = vpack.c.b16 %v316, %v314
        %v329 = vpack.c.b16 %v317, %v315
        %v330 = vpack.c.b16 %v320, %v318
        %v331 = vpack.c.b16 %v321, %v319
        %v332 = vpack.c.b16 %v324, %v322
        %v333 = vpack.c.b16 %v325, %v323
        %vm342 = vcmask 523264
        %v344 = vsel %vm342, %v301, 0
        %346 = vmatprep.subr.bf16.mxu0 %v327
        %347 = vmatpush1.bf16.msra.mxu0 %v326
        %348 = vmatprep.subr.bf16.mxu0 %v329
        %349 = vmatpush1.bf16.msra.mxu0 %v328
        %350 = vmatprep.subr.bf16.mxu0 %v331
        %351 = vmatpush1.bf16.msra.mxu0 %v330
        %352 = vmatprep.subr.bf16.mxu0 %v333
        %353 = vmatpush1.bf16.msra.mxu0 %v332
        %354 = vmatprep.subr.bf16.mxu0 0
        %355 = vmatpush1.bf16.msra.mxu0 0
        %356 = vmatprep.subr.bf16.mxu0 0
        %357 = vmatpush1.bf16.msra.mxu0 0
        %358 = vmatprep.subr.bf16.mxu0 0
        %359 = vmatpush1.bf16.msra.mxu0 0
        %360 = vmatprep.subr.bf16.mxu0 0
        %361 = vmatpush1.bf16.msra.mxu0 0
        %362 = vmatprep.subr.bf16.mxu0 0
        %363 = vmatpush1.bf16.msra.mxu0 0
        %364 = vmatprep.subr.bf16.mxu0 0
        %365 = vmatpush1.bf16.msra.mxu0 0
        %366 = vmatprep.subr.bf16.mxu0 0
        %367 = vmatpush1.bf16.msra.mxu0 0
        %368 = vmatprep.subr.bf16.mxu0 0
        %369 = vmatpush1.bf16.msra.mxu0 0
        %370 = vmatprep.subr.bf16.mxu0 0
        %371 = vmatpush1.bf16.msra.mxu0 0
        %372 = vmatprep.subr.bf16.mxu0 0
        %373 = vmatpush1.bf16.msra.mxu0 0
        %374 = vmatprep.subr.bf16.mxu0 0
        %375 = vmatpush1.bf16.msra.mxu0 0
        %376 = vmatprep.subr.bf16.mxu0 0
        %377 = vmatpush1.bf16.msra.mxu0 0
        %378 = vmatprep.mubr.bf16.mxu0 0
        %379 = vmatmul.mubr.bf16.gmra.mrb[0].mxu0 %v344
        %v380 = vpop.f32.mrb[0].mxu0
        %v381 = vadd.f32 0.0, %v380
        %v382 = vpop.f32.mrb[0].mxu0
        %v383 = vadd.f32 0.0, %v382
        %v384 = vpop.f32.mrb[0].mxu0
        %v385 = vadd.f32 0.0, %v384
        %v386 = vpop.f32.mrb[0].mxu0
        %v387 = vadd.f32 0.0, %v386
        %388 = vdwg.mxu0
        %v397 = vunpack.c.l.b16 %v263
        %v398 = vunpack.c.h.b16 %v263
        %v399 = vunpack.c.l.b16 %v264
        %v400 = vunpack.c.h.b16 %v264
        %v401 = vunpack.c.l.b16 %v265
        %v402 = vunpack.c.h.b16 %v265
        %v403 = vunpack.c.l.b16 %v266
        %v404 = vunpack.c.h.b16 %v266
        %v405 = vunpack.c.l.b16 %v267
        %v406 = vunpack.c.h.b16 %v267
        %v407 = vunpack.c.l.b16 %v268
        %v408 = vunpack.c.h.b16 %v268
        %v409 = vunpack.c.l.b16 %v269
        %v410 = vunpack.c.h.b16 %v269
        %v411 = vunpack.c.l.b16 %v270
        %v412 = vunpack.c.h.b16 %v270
        %v413 = vpack.c.b16 %v399, %v397
        %v414 = vpack.c.b16 %v400, %v398
        %v415 = vpack.c.b16 %v403, %v401
        %v416 = vpack.c.b16 %v404, %v402
        %v417 = vpack.c.b16 %v407, %v405
        %v418 = vpack.c.b16 %v408, %v406
        %v419 = vpack.c.b16 %v411, %v409
        %v420 = vpack.c.b16 %v412, %v410
        %v429 = vsel %vm342, %v287, 0
        %431 = vmatprep.subr.bf16.mxu0 %v414
        %432 = vmatpush1.bf16.msra.mxu0 %v413
        %433 = vmatprep.subr.bf16.mxu0 %v416
        %434 = vmatpush1.bf16.msra.mxu0 %v415
        %435 = vmatprep.subr.bf16.mxu0 %v418
        %436 = vmatpush1.bf16.msra.mxu0 %v417
        %437 = vmatprep.subr.bf16.mxu0 %v420
        %438 = vmatpush1.bf16.msra.mxu0 %v419
        %439 = vmatprep.subr.bf16.mxu0 0
        %440 = vmatpush1.bf16.msra.mxu0 0
        %441 = vmatprep.subr.bf16.mxu0 0
        %442 = vmatpush1.bf16.msra.mxu0 0
        %443 = vmatprep.subr.bf16.mxu0 0
        %444 = vmatpush1.bf16.msra.mxu0 0
        %445 = vmatprep.subr.bf16.mxu0 0
        %446 = vmatpush1.bf16.msra.mxu0 0
        %447 = vmatprep.subr.bf16.mxu0 0
        %448 = vmatpush1.bf16.msra.mxu0 0
        %449 = vmatprep.subr.bf16.mxu0 0
        %450 = vmatpush1.bf16.msra.mxu0 0
        %451 = vmatprep.subr.bf16.mxu0 0
        %452 = vmatpush1.bf16.msra.mxu0 0
        %453 = vmatprep.subr.bf16.mxu0 0
        %454 = vmatpush1.bf16.msra.mxu0 0
        %455 = vmatprep.subr.bf16.mxu0 0
        %456 = vmatpush1.bf16.msra.mxu0 0
        %457 = vmatprep.subr.bf16.mxu0 0
        %458 = vmatpush1.bf16.msra.mxu0 0
        %459 = vmatprep.subr.bf16.mxu0 0
        %460 = vmatpush1.bf16.msra.mxu0 0
        %461 = vmatprep.subr.bf16.mxu0 0
        %462 = vmatpush1.bf16.msra.mxu0 0
        %463 = vmatprep.mubr.bf16.mxu0 0
        %464 = vmatmul.mubr.bf16.gmra.mrb[0].mxu0 %v429
        %v465 = vpop.f32.mrb[0].mxu0
        %v466 = vadd.f32 %v381, %v465
        %v467 = vpop.f32.mrb[0].mxu0
        %v468 = vadd.f32 %v383, %v467
        %v469 = vpop.f32.mrb[0].mxu0
        %v470 = vadd.f32 %v385, %v469
        %v471 = vpop.f32.mrb[0].mxu0
        %v472 = vadd.f32 %v387, %v471
        %473 = vdwg.mxu0
        %v474 = vld [vmem:[#allocation2] sm:$0xe]
        %s475 = scalar_lea.vmem %s1, 128
        %v476 = vld [vmem:[%s475] sm:$0xff]
        %v477 = vld [vmem:[%s475 + $0x8] sm:$0xff]
        %v478 = vld [vmem:[%s475 + $0x10] sm:$0xff]
        %v479 = vld [vmem:[%s475 + $0x18] sm:$0xff]
        %v480 = vld [vmem:[%s475 + $0x20] sm:$0xff]
        %v481 = vld [vmem:[%s475 + $0x28] sm:$0xff]
        %v482 = vld [vmem:[%s475 + $0x30] sm:$0xff]
        %v483 = vld [vmem:[%s475 + $0x38] sm:$0xff]
        %v485 = vunpack.c.l.b16 %v474
        %v486 = vpack.c.b16 %v285, %v485
        %vm487 = vcmask 1046528
        %v488 = vrot.slane %v486, 1
        %v489 = vrot.slane %v288, 1
        %v490 = vsel %vm487, %v488, %v489
        %v499 = vunpack.c.l.b16 %v476
        %v500 = vunpack.c.h.b16 %v476
        %v501 = vunpack.c.l.b16 %v477
        %v502 = vunpack.c.h.b16 %v477
        %v503 = vunpack.c.l.b16 %v478
        %v504 = vunpack.c.h.b16 %v478
        %v505 = vunpack.c.l.b16 %v479
        %v506 = vunpack.c.h.b16 %v479
        %v507 = vunpack.c.l.b16 %v480
        %v508 = vunpack.c.h.b16 %v480
        %v509 = vunpack.c.l.b16 %v481
        %v510 = vunpack.c.h.b16 %v481
        %v511 = vunpack.c.l.b16 %v482
        %v512 = vunpack.c.h.b16 %v482
        %v513 = vunpack.c.l.b16 %v483
        %v514 = vunpack.c.h.b16 %v483
        %v515 = vpack.c.b16 %v501, %v499
        %v516 = vpack.c.b16 %v502, %v500
        %v517 = vpack.c.b16 %v505, %v503
        %v518 = vpack.c.b16 %v506, %v504
        %v519 = vpack.c.b16 %v509, %v507
        %v520 = vpack.c.b16 %v510, %v508
        %v521 = vpack.c.b16 %v513, %v511
        %v522 = vpack.c.b16 %v514, %v512
        %v532 = vsel %vm342, %v490, 0
        %534 = vmatprep.subr.bf16.mxu0 %v516
        %535 = vmatpush1.bf16.msra.mxu0 %v515
        %536 = vmatprep.subr.bf16.mxu0 %v518
        %537 = vmatpush1.bf16.msra.mxu0 %v517
        %538 = vmatprep.subr.bf16.mxu0 %v520
        %539 = vmatpush1.bf16.msra.mxu0 %v519
        %540 = vmatprep.subr.bf16.mxu0 %v522
        %541 = vmatpush1.bf16.msra.mxu0 %v521
        %542 = vmatprep.subr.bf16.mxu0 0
        %543 = vmatpush1.bf16.msra.mxu0 0
        %544 = vmatprep.subr.bf16.mxu0 0
        %545 = vmatpush1.bf16.msra.mxu0 0
        %546 = vmatprep.subr.bf16.mxu0 0
        %547 = vmatpush1.bf16.msra.mxu0 0
        %548 = vmatprep.subr.bf16.mxu0 0
        %549 = vmatpush1.bf16.msra.mxu0 0
        %550 = vmatprep.subr.bf16.mxu0 0
        %551 = vmatpush1.bf16.msra.mxu0 0
        %552 = vmatprep.subr.bf16.mxu0 0
        %553 = vmatpush1.bf16.msra.mxu0 0
        %554 = vmatprep.subr.bf16.mxu0 0
        %555 = vmatpush1.bf16.msra.mxu0 0
        %556 = vmatprep.subr.bf16.mxu0 0
        %557 = vmatpush1.bf16.msra.mxu0 0
        %558 = vmatprep.subr.bf16.mxu0 0
        %559 = vmatpush1.bf16.msra.mxu0 0
        %560 = vmatprep.subr.bf16.mxu0 0
        %561 = vmatpush1.bf16.msra.mxu0 0
        %562 = vmatprep.subr.bf16.mxu0 0
        %563 = vmatpush1.bf16.msra.mxu0 0
        %564 = vmatprep.subr.bf16.mxu0 0
        %565 = vmatpush1.bf16.msra.mxu0 0
        %566 = vmatprep.mubr.bf16.mxu0 0
        %567 = vmatmul.mubr.bf16.gmra.mrb[0].mxu0 %v532
        %v568 = vpop.f32.mrb[0].mxu0
        %v569 = vadd.f32 0.0, %v568
        %v570 = vpop.f32.mrb[0].mxu0
        %v571 = vadd.f32 0.0, %v570
        %v572 = vpop.f32.mrb[0].mxu0
        %v573 = vadd.f32 0.0, %v572
        %v574 = vpop.f32.mrb[0].mxu0
        %v575 = vadd.f32 0.0, %v574
        %576 = vdwg.mxu0
        %v577 = vadd.f32 %v466, %v569
        %v578 = vadd.f32 %v468, %v571
        %v579 = vadd.f32 %v470, %v573
        %v580 = vadd.f32 %v472, %v575
        %v582 = vlaneseq
        %v583 = vshrl.u32 %v582, 7
        %v584 = vsub.s32 0, %v583
        %v585 = vrot.slane %v196, %v584
        %v586 = vlaneseq
        %v587 = vshrl.u32 %v586, 7
        %v588 = vsub.s32 1, %v587
        %v589 = vrot.slane %v196, %v588
        %v592 = vadd.f32 %v577, %v585
        %v593 = vadd.f32 %v578, %v589
        %v594 = vadd.f32 %v579, %v585
        %v595 = vadd.f32 %v580, %v589
        %v596 = vadd.f32 %v592, %v593
        %597 = vadd.xlane.f32.xlu0 %v596
        %v598 = vpop.xlane.xlu0 %597
        %v599 = vadd.f32 %v594, %v595
        %600 = vadd.xlane.f32.xlu0 %v599
        %v601 = vpop.xlane.xlu0 %600
        %v602 = vrcp.pop 256.0
        %v603 = vmul.f32 %v598, %v602
        %v604 = vmul.f32 %v601, %v602
        %v605 = vmul.f32 %v592, %v592
        %v606 = vmul.f32 %v593, %v593
        %v607 = vmul.f32 %v594, %v594
        %v608 = vmul.f32 %v595, %v595
        %v609 = vadd.f32 %v605, %v606
        %610 = vadd.xlane.f32.xlu0 %v609
        %v611 = vpop.xlane.xlu0 %610
        %v612 = vadd.f32 %v607, %v608
        %613 = vadd.xlane.f32.xlu0 %v612
        %v614 = vpop.xlane.xlu0 %613
        %v615 = vmul.f32 %v611, %v602
        %v616 = vmul.f32 %v614, %v602
        %v617 = vmul.f32 %v603, %v603
        %v618 = vmul.f32 %v604, %v604
        %v619 = vsub.f32 %v615, %v617
        %v620 = vsub.f32 %v616, %v618
        %v621 = vmax.f32 %v619, 0.0
        %v622 = vmax.f32 %v620, 0.0
        %v623 = vsub.f32 %v592, %v603
        %v624 = vsub.f32 %v593, %v603
        %v625 = vsub.f32 %v594, %v604
        %v626 = vsub.f32 %v595, %v604
        %v627 = vadd.f32 %v621, 1e-05
        %v628 = vadd.f32 %v622, 1e-05
        %v629 = vrsqrt.pop %v627
        %v630 = vrsqrt.pop %v628
        %v631 = vmul.f32 %v623, %v629
        %v632 = vmul.f32 %v624, %v629
        %v633 = vmul.f32 %v625, %v630
        %v634 = vmul.f32 %v626, %v630
        %v636 = vlaneseq
        %v637 = vshrl.u32 %v636, 7
        %v638 = vsub.s32 0, %v637
        %v639 = vrot.slane %v198, %v638
        %v640 = vlaneseq
        %v641 = vshrl.u32 %v640, 7
        %v642 = vsub.s32 1, %v641
        %v643 = vrot.slane %v198, %v642
        %v646 = vmul.f32 %v631, %v639
        %v647 = vmul.f32 %v632, %v643
        %v648 = vmul.f32 %v633, %v639
        %v649 = vmul.f32 %v634, %v643
        %v651 = vlaneseq
        %v652 = vshrl.u32 %v651, 7
        %v653 = vsub.s32 0, %v652
        %v654 = vrot.slane %v200, %v653
        %v655 = vlaneseq
        %v656 = vshrl.u32 %v655, 7
        %v657 = vsub.s32 1, %v656
        %v658 = vrot.slane %v200, %v657
        %v661 = vadd.f32 %v646, %v654
        %v662 = vadd.f32 %v647, %v658
        %v663 = vadd.f32 %v648, %v654
        %v664 = vadd.f32 %v649, %v658
        %v665 = vmax.f32 %v661, 0.0
        %v666 = vmax.f32 %v662, 0.0
        %v667 = vmax.f32 %v663, 0.0
        %v668 = vmax.f32 %v664, 0.0
        %v669 = vpack.c.bf16 %v667, %v665
        %v670 = vpack.c.bf16 %v668, %v666
        %671 = vst [vmem:[#allocation3 + $0x10] sm:$0xff] %v669
        %672 = vst [vmem:[#allocation3 + $0x18] sm:$0xff] %v670
        %vm673 = vcmask 1040384
        %vm674 = vmand %vm673, %vm211
        %v675 = vld [vmem:[#allocation3] sm:$0x1]
        %v676 = vsel %vm674, 0, %v675
        %677 = vst [vmem:[#allocation3] sm:$0x1] %v676
        %v678 = vld [vmem:[#allocation3 + $0x8] sm:$0x1]
        %v679 = vsel %vm674, 0, %v678
        %680 = vst [vmem:[#allocation3 + $0x8] sm:$0x1] %v679
        %v682 = vshrl.u32 %v669, 16
        %v684 = vrot.slane %v682, 7
        %v685 = vshll.u32 %v669, 16
        %v687 = vor.u32 %v684, %v685
        %v689 = vshrl.u32 %v670, 16
        %v691 = vrot.slane %v689, 7
        %v692 = vshll.u32 %v670, 16
        %v694 = vor.u32 %v691, %v692
        %vm697 = vcmask 1047552
        %vm698 = vmand %vm697, %vm216
        %v699 = vld [vmem:[#allocation3] sm:$0xff]
        %v700 = vsel %vm698, %v687, %v699
        %701 = vst [vmem:[#allocation3] sm:$0xff] %v700
        %v702 = vld [vmem:[#allocation3 + $0x8] sm:$0xff]
        %v703 = vsel %vm698, %v694, %v702
        %704 = vst [vmem:[#allocation3 + $0x8] sm:$0xff] %v703
        %v705 = vrot.slane %v685, 1
        %v706 = vor.u32 %v682, %v705
        %v707 = vrot.slane %v692, 1
        %v708 = vor.u32 %v689, %v707
        %vm711 = vmand %vm697, %vm289
        %v712 = vld [vmem:[#allocation3 + $0x20] sm:$0xff]
        %v713 = vsel %vm711, %v706, %v712
        %714 = vst [vmem:[#allocation3 + $0x20] sm:$0xff] %v713
        %v715 = vld [vmem:[#allocation3 + $0x28] sm:$0xff]
        %v716 = vsel %vm711, %v708, %v715
        %717 = vst [vmem:[#allocation3 + $0x28] sm:$0xff] %v716
        %vm718 = vcmask 1047559
        %vm719 = vsmask.f32 7966
        %vm720 = vmand %vm718, %vm719
        %v721 = vld [vmem:[#allocation3 + $0x20] sm:$0x80]
        %v722 = vsel %vm720, 0, %v721
        %723 = vst [vmem:[#allocation3 + $0x20] sm:$0x80] %v722
        %v724 = vld [vmem:[#allocation3 + $0x28] sm:$0x80]
        %v725 = vsel %vm720, 0, %v724
        %726 = vst [vmem:[#allocation3 + $0x28] sm:$0x80] %v725
        %v727 = vld [vmem:[#allocation3] sm:$0xff]
        %v728 = vld [vmem:[#allocation3 + $0x8] sm:$0xff]
        %v729 = vld [vmem:[#allocation3 + $0x10] sm:$0xff]
        %v730 = vld [vmem:[#allocation3 + $0x18] sm:$0xff]
        %v731 = vld [vmem:[#allocation3 + $0x20] sm:$0xff]
        %v732 = vld [vmem:[#allocation3 + $0x28] sm:$0xff]
        %v733 = vld [vmem:[%s2] sm:$0xff]
        %v734 = vld [vmem:[%s2 + $0x8] sm:$0xff]
        %v735 = vld [vmem:[%s2 + $0x10] sm:$0xff]
        %v736 = vld [vmem:[%s2 + $0x18] sm:$0xff]
        %v737 = vld [vmem:[%s2 + $0x20] sm:$0xff]
        %v738 = vld [vmem:[%s2 + $0x28] sm:$0xff]
        %v739 = vld [vmem:[%s2 + $0x30] sm:$0xff]
        %v740 = vld [vmem:[%s2 + $0x38] sm:$0xff]
        %v741 = vld [vmem:[%s2 + $0x40] sm:$0xff]
        %v742 = vld [vmem:[%s2 + $0x48] sm:$0xff]
        %v743 = vld [vmem:[%s2 + $0x50] sm:$0xff]
        %v744 = vld [vmem:[%s2 + $0x58] sm:$0xff]
        %v745 = vld [vmem:[%s2 + $0x60] sm:$0xff]
        %v746 = vld [vmem:[%s2 + $0x68] sm:$0xff]
        %v747 = vld [vmem:[%s2 + $0x70] sm:$0xff]
        %v748 = vld [vmem:[%s2 + $0x78] sm:$0xff]
        %v749 = vld [vmem:[%s2 + $0x80] sm:$0xff]
        %v750 = vld [vmem:[%s2 + $0x88] sm:$0xff]
        %v751 = vld [vmem:[%s2 + $0x90] sm:$0xff]
        %v752 = vld [vmem:[%s2 + $0x98] sm:$0xff]
        %v753 = vld [vmem:[%s2 + $0xa0] sm:$0xff]
        %v754 = vld [vmem:[%s2 + $0xa8] sm:$0xff]
        %v755 = vld [vmem:[%s2 + $0xb0] sm:$0xff]
        %v756 = vld [vmem:[%s2 + $0xb8] sm:$0xff]
        %v757 = vld [vmem:[%s2 + $0xc0] sm:$0xff]
        %v758 = vld [vmem:[%s2 + $0xc8] sm:$0xff]
        %v759 = vld [vmem:[%s2 + $0xd0] sm:$0xff]
        %v760 = vld [vmem:[%s2 + $0xd8] sm:$0xff]
        %v761 = vld [vmem:[%s2 + $0xe0] sm:$0xff]
        %v762 = vld [vmem:[%s2 + $0xe8] sm:$0xff]
        %v763 = vld [vmem:[%s2 + $0xf0] sm:$0xff]
        %v764 = vld [vmem:[%s2 + $0xf8] sm:$0xff]
        %v765 = vld [vmem:[%s2 + $0x100] sm:$0xff]
        %v766 = vld [vmem:[%s2 + $0x108] sm:$0xff]
        %v767 = vld [vmem:[%s2 + $0x110] sm:$0xff]
        %v768 = vld [vmem:[%s2 + $0x118] sm:$0xff]
        %v769 = vld [vmem:[%s2 + $0x120] sm:$0xff]
        %v770 = vld [vmem:[%s2 + $0x128] sm:$0xff]
        %v771 = vld [vmem:[%s2 + $0x130] sm:$0xff]
        %v772 = vld [vmem:[%s2 + $0x138] sm:$0xff]
        %v773 = vld [vmem:[%s2 + $0x140] sm:$0xff]
        %v774 = vld [vmem:[%s2 + $0x148] sm:$0xff]
        %v775 = vld [vmem:[%s2 + $0x150] sm:$0xff]
        %v776 = vld [vmem:[%s2 + $0x158] sm:$0xff]
        %v777 = vld [vmem:[%s2 + $0x160] sm:$0xff]
        %v778 = vld [vmem:[%s2 + $0x168] sm:$0xff]
        %v779 = vld [vmem:[%s2 + $0x170] sm:$0xff]
        %v780 = vld [vmem:[%s2 + $0x178] sm:$0xff]
        %v781 = vld [vmem:[%s2 + $0x180] sm:$0xff]
        %v782 = vld [vmem:[%s2 + $0x188] sm:$0xff]
        %v783 = vld [vmem:[%s2 + $0x190] sm:$0xff]
        %v784 = vld [vmem:[%s2 + $0x198] sm:$0xff]
        %v785 = vld [vmem:[%s2 + $0x1a0] sm:$0xff]
        %v786 = vld [vmem:[%s2 + $0x1a8] sm:$0xff]
        %v787 = vld [vmem:[%s2 + $0x1b0] sm:$0xff]
        %v788 = vld [vmem:[%s2 + $0x1b8] sm:$0xff]
        %v789 = vld [vmem:[%s2 + $0x1c0] sm:$0xff]
        %v790 = vld [vmem:[%s2 + $0x1c8] sm:$0xff]
        %v791 = vld [vmem:[%s2 + $0x1d0] sm:$0xff]
        %v792 = vld [vmem:[%s2 + $0x1d8] sm:$0xff]
        %v793 = vld [vmem:[%s2 + $0x1e0] sm:$0xff]
        %v794 = vld [vmem:[%s2 + $0x1e8] sm:$0xff]
        %v795 = vld [vmem:[%s2 + $0x1f0] sm:$0xff]
        %v796 = vld [vmem:[%s2 + $0x1f8] sm:$0xff]
        %v797 = vld [vmem:[%s2 + $0x200] sm:$0xff]
        %v798 = vld [vmem:[%s2 + $0x208] sm:$0xff]
        %v799 = vld [vmem:[%s2 + $0x210] sm:$0xff]
        %v800 = vld [vmem:[%s2 + $0x218] sm:$0xff]
        %v801 = vld [vmem:[%s2 + $0x220] sm:$0xff]
        %v802 = vld [vmem:[%s2 + $0x228] sm:$0xff]
        %v803 = vld [vmem:[%s2 + $0x230] sm:$0xff]
        %v804 = vld [vmem:[%s2 + $0x238] sm:$0xff]
        %v805 = vld [vmem:[%s2 + $0x240] sm:$0xff]
        %v806 = vld [vmem:[%s2 + $0x248] sm:$0xff]
        %v807 = vld [vmem:[%s2 + $0x250] sm:$0xff]
        %v808 = vld [vmem:[%s2 + $0x258] sm:$0xff]
        %v809 = vld [vmem:[%s2 + $0x260] sm:$0xff]
        %v810 = vld [vmem:[%s2 + $0x268] sm:$0xff]
        %v811 = vld [vmem:[%s2 + $0x270] sm:$0xff]
        %v812 = vld [vmem:[%s2 + $0x278] sm:$0xff]
        %v813 = vld [vmem:[%s2 + $0x280] sm:$0xff]
        %v814 = vld [vmem:[%s2 + $0x288] sm:$0xff]
        %v815 = vld [vmem:[%s2 + $0x290] sm:$0xff]
        %v816 = vld [vmem:[%s2 + $0x298] sm:$0xff]
        %v817 = vld [vmem:[%s2 + $0x2a0] sm:$0xff]
        %v818 = vld [vmem:[%s2 + $0x2a8] sm:$0xff]
        %v819 = vld [vmem:[%s2 + $0x2b0] sm:$0xff]
        %v820 = vld [vmem:[%s2 + $0x2b8] sm:$0xff]
        %v821 = vld [vmem:[%s2 + $0x2c0] sm:$0xff]
        %v822 = vld [vmem:[%s2 + $0x2c8] sm:$0xff]
        %v823 = vld [vmem:[%s2 + $0x2d0] sm:$0xff]
        %v824 = vld [vmem:[%s2 + $0x2d8] sm:$0xff]
        %v825 = vld [vmem:[%s2 + $0x2e0] sm:$0xff]
        %v826 = vld [vmem:[%s2 + $0x2e8] sm:$0xff]
        %v827 = vld [vmem:[%s2 + $0x2f0] sm:$0xff]
        %v828 = vld [vmem:[%s2 + $0x2f8] sm:$0xff]
        %v830 = vlaneseq
        %v831 = vshrl.u32 %v830, 7
        %v832 = vsub.s32 0, %v831
        %v833 = vrot.slane %v202, %v832
        %v834 = vlaneseq
        %v835 = vshrl.u32 %v834, 7
        %v836 = vsub.s32 1, %v835
        %v837 = vrot.slane %v202, %v836
        %v936 = vunpack.c.l.b16 %v733
        %v937 = vunpack.c.h.b16 %v733
        %v938 = vunpack.c.l.b16 %v734
        %v939 = vunpack.c.h.b16 %v734
        %v940 = vunpack.c.l.b16 %v735
        %v941 = vunpack.c.h.b16 %v735
        %v942 = vunpack.c.l.b16 %v736
        %v943 = vunpack.c.h.b16 %v736
        %v944 = vunpack.c.l.b16 %v737
        %v945 = vunpack.c.h.b16 %v737
        %v946 = vunpack.c.l.b16 %v738
        %v947 = vunpack.c.h.b16 %v738
        %v948 = vunpack.c.l.b16 %v739
        %v949 = vunpack.c.h.b16 %v739
        %v950 = vunpack.c.l.b16 %v740
        %v951 = vunpack.c.h.b16 %v740
        %v952 = vunpack.c.l.b16 %v741
        %v953 = vunpack.c.h.b16 %v741
        %v954 = vunpack.c.l.b16 %v742
        %v955 = vunpack.c.h.b16 %v742
        %v956 = vunpack.c.l.b16 %v743
        %v957 = vunpack.c.h.b16 %v743
        %v958 = vunpack.c.l.b16 %v744
        %v959 = vunpack.c.h.b16 %v744
        %v960 = vunpack.c.l.b16 %v745
        %v961 = vunpack.c.h.b16 %v745
        %v962 = vunpack.c.l.b16 %v746
        %v963 = vunpack.c.h.b16 %v746
        %v964 = vunpack.c.l.b16 %v747
        %v965 = vunpack.c.h.b16 %v747
        %v966 = vunpack.c.l.b16 %v748
        %v967 = vunpack.c.h.b16 %v748
        %v968 = vunpack.c.l.b16 %v749
        %v969 = vunpack.c.h.b16 %v749
        %v970 = vunpack.c.l.b16 %v750
        %v971 = vunpack.c.h.b16 %v750
        %v972 = vunpack.c.l.b16 %v751
        %v973 = vunpack.c.h.b16 %v751
        %v974 = vunpack.c.l.b16 %v752
        %v975 = vunpack.c.h.b16 %v752
        %v976 = vunpack.c.l.b16 %v753
        %v977 = vunpack.c.h.b16 %v753
        %v978 = vunpack.c.l.b16 %v754
        %v979 = vunpack.c.h.b16 %v754
        %v980 = vunpack.c.l.b16 %v755
        %v981 = vunpack.c.h.b16 %v755
        %v982 = vunpack.c.l.b16 %v756
        %v983 = vunpack.c.h.b16 %v756
        %v984 = vunpack.c.l.b16 %v757
        %v985 = vunpack.c.h.b16 %v757
        %v986 = vunpack.c.l.b16 %v758
        %v987 = vunpack.c.h.b16 %v758
        %v988 = vunpack.c.l.b16 %v759
        %v989 = vunpack.c.h.b16 %v759
        %v990 = vunpack.c.l.b16 %v760
        %v991 = vunpack.c.h.b16 %v760
        %v992 = vunpack.c.l.b16 %v761
        %v993 = vunpack.c.h.b16 %v761
        %v994 = vunpack.c.l.b16 %v762
        %v995 = vunpack.c.h.b16 %v762
        %v996 = vunpack.c.l.b16 %v763
        %v997 = vunpack.c.h.b16 %v763
        %v998 = vunpack.c.l.b16 %v764
        %v999 = vunpack.c.h.b16 %v764
        %v1000 = vunpack.c.l.b16 %v765
        %v1001 = vunpack.c.h.b16 %v765
        %v1002 = vunpack.c.l.b16 %v766
        %v1003 = vunpack.c.h.b16 %v766
        %v1004 = vunpack.c.l.b16 %v767
        %v1005 = vunpack.c.h.b16 %v767
        %v1006 = vunpack.c.l.b16 %v768
        %v1007 = vunpack.c.h.b16 %v768
        %v1008 = vunpack.c.l.b16 %v769
        %v1009 = vunpack.c.h.b16 %v769
        %v1010 = vunpack.c.l.b16 %v770
        %v1011 = vunpack.c.h.b16 %v770
        %v1012 = vunpack.c.l.b16 %v771
        %v1013 = vunpack.c.h.b16 %v771
        %v1014 = vunpack.c.l.b16 %v772
        %v1015 = vunpack.c.h.b16 %v772
        %v1016 = vunpack.c.l.b16 %v773
        %v1017 = vunpack.c.h.b16 %v773
        %v1018 = vunpack.c.l.b16 %v774
        %v1019 = vunpack.c.h.b16 %v774
        %v1020 = vunpack.c.l.b16 %v775
        %v1021 = vunpack.c.h.b16 %v775
        %v1022 = vunpack.c.l.b16 %v776
        %v1023 = vunpack.c.h.b16 %v776
        %v1024 = vunpack.c.l.b16 %v777
        %v1025 = vunpack.c.h.b16 %v777
        %v1026 = vunpack.c.l.b16 %v778
        %v1027 = vunpack.c.h.b16 %v778
        %v1028 = vunpack.c.l.b16 %v779
        %v1029 = vunpack.c.h.b16 %v779
        %v1030 = vunpack.c.l.b16 %v780
        %v1031 = vunpack.c.h.b16 %v780
        %v1032 = vunpack.c.l.b16 %v781
        %v1033 = vunpack.c.h.b16 %v781
        %v1034 = vunpack.c.l.b16 %v782
        %v1035 = vunpack.c.h.b16 %v782
        %v1036 = vunpack.c.l.b16 %v783
        %v1037 = vunpack.c.h.b16 %v783
        %v1038 = vunpack.c.l.b16 %v784
        %v1039 = vunpack.c.h.b16 %v784
        %v1040 = vunpack.c.l.b16 %v785
        %v1041 = vunpack.c.h.b16 %v785
        %v1042 = vunpack.c.l.b16 %v786
        %v1043 = vunpack.c.h.b16 %v786
        %v1044 = vunpack.c.l.b16 %v787
        %v1045 = vunpack.c.h.b16 %v787
        %v1046 = vunpack.c.l.b16 %v788
        %v1047 = vunpack.c.h.b16 %v788
        %v1048 = vunpack.c.l.b16 %v789
        %v1049 = vunpack.c.h.b16 %v789
        %v1050 = vunpack.c.l.b16 %v790
        %v1051 = vunpack.c.h.b16 %v790
        %v1052 = vunpack.c.l.b16 %v791
        %v1053 = vunpack.c.h.b16 %v791
        %v1054 = vunpack.c.l.b16 %v792
        %v1055 = vunpack.c.h.b16 %v792
        %v1056 = vunpack.c.l.b16 %v793
        %v1057 = vunpack.c.h.b16 %v793
        %v1058 = vunpack.c.l.b16 %v794
        %v1059 = vunpack.c.h.b16 %v794
        %v1060 = vunpack.c.l.b16 %v795
        %v1061 = vunpack.c.h.b16 %v795
        %v1062 = vunpack.c.l.b16 %v796
        %v1063 = vunpack.c.h.b16 %v796
        %v1064 = vunpack.c.l.b16 %v797
        %v1065 = vunpack.c.h.b16 %v797
        %v1066 = vunpack.c.l.b16 %v798
        %v1067 = vunpack.c.h.b16 %v798
        %v1068 = vunpack.c.l.b16 %v799
        %v1069 = vunpack.c.h.b16 %v799
        %v1070 = vunpack.c.l.b16 %v800
        %v1071 = vunpack.c.h.b16 %v800
        %v1072 = vunpack.c.l.b16 %v801
        %v1073 = vunpack.c.h.b16 %v801
        %v1074 = vunpack.c.l.b16 %v802
        %v1075 = vunpack.c.h.b16 %v802
        %v1076 = vunpack.c.l.b16 %v803
        %v1077 = vunpack.c.h.b16 %v803
        %v1078 = vunpack.c.l.b16 %v804
        %v1079 = vunpack.c.h.b16 %v804
        %v1080 = vunpack.c.l.b16 %v805
        %v1081 = vunpack.c.h.b16 %v805
        %v1082 = vunpack.c.l.b16 %v806
        %v1083 = vunpack.c.h.b16 %v806
        %v1084 = vunpack.c.l.b16 %v807
        %v1085 = vunpack.c.h.b16 %v807
        %v1086 = vunpack.c.l.b16 %v808
        %v1087 = vunpack.c.h.b16 %v808
        %v1088 = vunpack.c.l.b16 %v809
        %v1089 = vunpack.c.h.b16 %v809
        %v1090 = vunpack.c.l.b16 %v810
        %v1091 = vunpack.c.h.b16 %v810
        %v1092 = vunpack.c.l.b16 %v811
        %v1093 = vunpack.c.h.b16 %v811
        %v1094 = vunpack.c.l.b16 %v812
        %v1095 = vunpack.c.h.b16 %v812
        %v1096 = vunpack.c.l.b16 %v813
        %v1097 = vunpack.c.h.b16 %v813
        %v1098 = vunpack.c.l.b16 %v814
        %v1099 = vunpack.c.h.b16 %v814
        %v1100 = vunpack.c.l.b16 %v815
        %v1101 = vunpack.c.h.b16 %v815
        %v1102 = vunpack.c.l.b16 %v816
        %v1103 = vunpack.c.h.b16 %v816
        %v1104 = vunpack.c.l.b16 %v817
        %v1105 = vunpack.c.h.b16 %v817
        %v1106 = vunpack.c.l.b16 %v818
        %v1107 = vunpack.c.h.b16 %v818
        %v1108 = vunpack.c.l.b16 %v819
        %v1109 = vunpack.c.h.b16 %v819
        %v1110 = vunpack.c.l.b16 %v820
        %v1111 = vunpack.c.h.b16 %v820
        %v1112 = vunpack.c.l.b16 %v821
        %v1113 = vunpack.c.h.b16 %v821
        %v1114 = vunpack.c.l.b16 %v822
        %v1115 = vunpack.c.h.b16 %v822
        %v1116 = vunpack.c.l.b16 %v823
        %v1117 = vunpack.c.h.b16 %v823
        %v1118 = vunpack.c.l.b16 %v824
        %v1119 = vunpack.c.h.b16 %v824
        %v1120 = vunpack.c.l.b16 %v825
        %v1121 = vunpack.c.h.b16 %v825
        %v1122 = vunpack.c.l.b16 %v826
        %v1123 = vunpack.c.h.b16 %v826
        %v1124 = vunpack.c.l.b16 %v827
        %v1125 = vunpack.c.h.b16 %v827
        %v1126 = vunpack.c.l.b16 %v828
        %v1127 = vunpack.c.h.b16 %v828
        %v1128 = vpack.c.b16 %v938, %v936
        %v1129 = vpack.c.b16 %v939, %v937
        %v1130 = vpack.c.b16 %v942, %v940
        %v1131 = vpack.c.b16 %v943, %v941
        %v1132 = vpack.c.b16 %v946, %v944
        %v1133 = vpack.c.b16 %v947, %v945
        %v1134 = vpack.c.b16 %v950, %v948
        %v1135 = vpack.c.b16 %v951, %v949
        %v1136 = vpack.c.b16 %v954, %v952
        %v1137 = vpack.c.b16 %v955, %v953
        %v1138 = vpack.c.b16 %v958, %v956
        %v1139 = vpack.c.b16 %v959, %v957
        %v1140 = vpack.c.b16 %v962, %v960
        %v1141 = vpack.c.b16 %v963, %v961
        %v1142 = vpack.c.b16 %v966, %v964
        %v1143 = vpack.c.b16 %v967, %v965
        %v1144 = vpack.c.b16 %v970, %v968
        %v1145 = vpack.c.b16 %v971, %v969
        %v1146 = vpack.c.b16 %v974, %v972
        %v1147 = vpack.c.b16 %v975, %v973
        %v1148 = vpack.c.b16 %v978, %v976
        %v1149 = vpack.c.b16 %v979, %v977
        %v1150 = vpack.c.b16 %v982, %v980
        %v1151 = vpack.c.b16 %v983, %v981
        %v1152 = vpack.c.b16 %v986, %v984
        %v1153 = vpack.c.b16 %v987, %v985
        %v1154 = vpack.c.b16 %v990, %v988
        %v1155 = vpack.c.b16 %v991, %v989
        %v1156 = vpack.c.b16 %v994, %v992
        %v1157 = vpack.c.b16 %v995, %v993
        %v1158 = vpack.c.b16 %v998, %v996
        %v1159 = vpack.c.b16 %v999, %v997
        %v1160 = vpack.c.b16 %v1002, %v1000
        %v1161 = vpack.c.b16 %v1003, %v1001
        %v1162 = vpack.c.b16 %v1006, %v1004
        %v1163 = vpack.c.b16 %v1007, %v1005
        %v1164 = vpack.c.b16 %v1010, %v1008
        %v1165 = vpack.c.b16 %v1011, %v1009
        %v1166 = vpack.c.b16 %v1014, %v1012
        %v1167 = vpack.c.b16 %v1015, %v1013
        %v1168 = vpack.c.b16 %v1018, %v1016
        %v1169 = vpack.c.b16 %v1019, %v1017
        %v1170 = vpack.c.b16 %v1022, %v1020
        %v1171 = vpack.c.b16 %v1023, %v1021
        %v1172 = vpack.c.b16 %v1026, %v1024
        %v1173 = vpack.c.b16 %v1027, %v1025
        %v1174 = vpack.c.b16 %v1030, %v1028
        %v1175 = vpack.c.b16 %v1031, %v1029
        %v1176 = vpack.c.b16 %v1034, %v1032
        %v1177 = vpack.c.b16 %v1035, %v1033
        %v1178 = vpack.c.b16 %v1038, %v1036
        %v1179 = vpack.c.b16 %v1039, %v1037
        %v1180 = vpack.c.b16 %v1042, %v1040
        %v1181 = vpack.c.b16 %v1043, %v1041
        %v1182 = vpack.c.b16 %v1046, %v1044
        %v1183 = vpack.c.b16 %v1047, %v1045
        %v1184 = vpack.c.b16 %v1050, %v1048
        %v1185 = vpack.c.b16 %v1051, %v1049
        %v1186 = vpack.c.b16 %v1054, %v1052
        %v1187 = vpack.c.b16 %v1055, %v1053
        %v1188 = vpack.c.b16 %v1058, %v1056
        %v1189 = vpack.c.b16 %v1059, %v1057
        %v1190 = vpack.c.b16 %v1062, %v1060
        %v1191 = vpack.c.b16 %v1063, %v1061
        %v1192 = vpack.c.b16 %v1066, %v1064
        %v1193 = vpack.c.b16 %v1067, %v1065
        %v1194 = vpack.c.b16 %v1070, %v1068
        %v1195 = vpack.c.b16 %v1071, %v1069
        %v1196 = vpack.c.b16 %v1074, %v1072
        %v1197 = vpack.c.b16 %v1075, %v1073
        %v1198 = vpack.c.b16 %v1078, %v1076
        %v1199 = vpack.c.b16 %v1079, %v1077
        %v1200 = vpack.c.b16 %v1082, %v1080
        %v1201 = vpack.c.b16 %v1083, %v1081
        %v1202 = vpack.c.b16 %v1086, %v1084
        %v1203 = vpack.c.b16 %v1087, %v1085
        %v1204 = vpack.c.b16 %v1090, %v1088
        %v1205 = vpack.c.b16 %v1091, %v1089
        %v1206 = vpack.c.b16 %v1094, %v1092
        %v1207 = vpack.c.b16 %v1095, %v1093
        %v1208 = vpack.c.b16 %v1098, %v1096
        %v1209 = vpack.c.b16 %v1099, %v1097
        %v1210 = vpack.c.b16 %v1102, %v1100
        %v1211 = vpack.c.b16 %v1103, %v1101
        %v1212 = vpack.c.b16 %v1106, %v1104
        %v1213 = vpack.c.b16 %v1107, %v1105
        %v1214 = vpack.c.b16 %v1110, %v1108
        %v1215 = vpack.c.b16 %v1111, %v1109
        %v1216 = vpack.c.b16 %v1114, %v1112
        %v1217 = vpack.c.b16 %v1115, %v1113
        %v1218 = vpack.c.b16 %v1118, %v1116
        %v1219 = vpack.c.b16 %v1119, %v1117
        %v1220 = vpack.c.b16 %v1122, %v1120
        %v1221 = vpack.c.b16 %v1123, %v1121
        %v1222 = vpack.c.b16 %v1126, %v1124
        %v1223 = vpack.c.b16 %v1127, %v1125
        %1320 = vmatprep.subr.bf16.mxu0 %v1129
        %1321 = vmatpush1.bf16.msra.mxu0 %v1128
        %1322 = vmatprep.subr.bf16.mxu0 %v1131
        %1323 = vmatpush1.bf16.msra.mxu0 %v1130
        %1324 = vmatprep.subr.bf16.mxu0 %v1133
        %1325 = vmatpush1.bf16.msra.mxu0 %v1132
        %1326 = vmatprep.subr.bf16.mxu0 %v1135
        %1327 = vmatpush1.bf16.msra.mxu0 %v1134
        %1328 = vmatprep.subr.bf16.mxu0 %v1137
        %1329 = vmatpush1.bf16.msra.mxu0 %v1136
        %1330 = vmatprep.subr.bf16.mxu0 %v1139
        %1331 = vmatpush1.bf16.msra.mxu0 %v1138
        %1332 = vmatprep.subr.bf16.mxu0 %v1141
        %1333 = vmatpush1.bf16.msra.mxu0 %v1140
        %1334 = vmatprep.subr.bf16.mxu0 %v1143
        %1335 = vmatpush1.bf16.msra.mxu0 %v1142
        %1336 = vmatprep.subr.bf16.mxu0 %v1145
        %1337 = vmatpush1.bf16.msra.mxu0 %v1144
        %1338 = vmatprep.subr.bf16.mxu0 %v1147
        %1339 = vmatpush1.bf16.msra.mxu0 %v1146
        %1340 = vmatprep.subr.bf16.mxu0 %v1149
        %1341 = vmatpush1.bf16.msra.mxu0 %v1148
        %1342 = vmatprep.subr.bf16.mxu0 %v1151
        %1343 = vmatpush1.bf16.msra.mxu0 %v1150
        %1344 = vmatprep.subr.bf16.mxu0 %v1153
        %1345 = vmatpush1.bf16.msra.mxu0 %v1152
        %1346 = vmatprep.subr.bf16.mxu0 %v1155
        %1347 = vmatpush1.bf16.msra.mxu0 %v1154
        %1348 = vmatprep.subr.bf16.mxu0 %v1157
        %1349 = vmatpush1.bf16.msra.mxu0 %v1156
        %1350 = vmatprep.subr.bf16.mxu0 %v1159
        %1351 = vmatpush1.bf16.msra.mxu0 %v1158
        %1352 = vmatprep.mubr.bf16.mxu0 %v728
        %1353 = vmatmul.mubr.bf16.gmra.mrb[0].mxu0 %v727
        %v1354 = vpop.f32.mrb[0].mxu0
        %v1355 = vadd.f32 %v833, %v1354
        %v1356 = vpop.f32.mrb[0].mxu0
        %v1357 = vadd.f32 %v837, %v1356
        %v1358 = vpop.f32.mrb[0].mxu0
        %v1359 = vadd.f32 %v833, %v1358
        %v1360 = vpop.f32.mrb[0].mxu0
        %v1361 = vadd.f32 %v837, %v1360
        %1362 = vdwg.mxu0
        %1363 = vmatprep.subr.bf16.mxu0 %v1161
        %1364 = vmatpush1.bf16.msra.mxu0 %v1160
        %1365 = vmatprep.subr.bf16.mxu0 %v1163
        %1366 = vmatpush1.bf16.msra.mxu0 %v1162
        %1367 = vmatprep.subr.bf16.mxu0 %v1165
        %1368 = vmatpush1.bf16.msra.mxu0 %v1164
        %1369 = vmatprep.subr.bf16.mxu0 %v1167
        %1370 = vmatpush1.bf16.msra.mxu0 %v1166
        %1371 = vmatprep.subr.bf16.mxu0 %v1169
        %1372 = vmatpush1.bf16.msra.mxu0 %v1168
        %1373 = vmatprep.subr.bf16.mxu0 %v1171
        %1374 = vmatpush1.bf16.msra.mxu0 %v1170
        %1375 = vmatprep.subr.bf16.mxu0 %v1173
        %1376 = vmatpush1.bf16.msra.mxu0 %v1172
        %1377 = vmatprep.subr.bf16.mxu0 %v1175
        %1378 = vmatpush1.bf16.msra.mxu0 %v1174
        %1379 = vmatprep.subr.bf16.mxu0 %v1177
        %1380 = vmatpush1.bf16.msra.mxu0 %v1176
        %1381 = vmatprep.subr.bf16.mxu0 %v1179
        %1382 = vmatpush1.bf16.msra.mxu0 %v1178
        %1383 = vmatprep.subr.bf16.mxu0 %v1181
        %1384 = vmatpush1.bf16.msra.mxu0 %v1180
        %1385 = vmatprep.subr.bf16.mxu0 %v1183
        %1386 = vmatpush1.bf16.msra.mxu0 %v1182
        %1387 = vmatprep.subr.bf16.mxu0 %v1185
        %1388 = vmatpush1.bf16.msra.mxu0 %v1184
        %1389 = vmatprep.subr.bf16.mxu0 %v1187
        %1390 = vmatpush1.bf16.msra.mxu0 %v1186
        %1391 = vmatprep.subr.bf16.mxu0 %v1189
        %1392 = vmatpush1.bf16.msra.mxu0 %v1188
        %1393 = vmatprep.subr.bf16.mxu0 %v1191
        %1394 = vmatpush1.bf16.msra.mxu0 %v1190
        %1395 = vmatprep.mubr.bf16.mxu0 %v730
        %1396 = vmatmul.mubr.bf16.gmra.mrb[0].mxu0 %v729
        %v1397 = vpop.f32.mrb[0].mxu0
        %v1398 = vadd.f32 %v1355, %v1397
        %v1399 = vpop.f32.mrb[0].mxu0
        %v1400 = vadd.f32 %v1357, %v1399
        %v1401 = vpop.f32.mrb[0].mxu0
        %v1402 = vadd.f32 %v1359, %v1401
        %v1403 = vpop.f32.mrb[0].mxu0
        %v1404 = vadd.f32 %v1361, %v1403
        %1405 = vdwg.mxu0
        %1406 = vmatprep.subr.bf16.mxu0 %v1193
        %1407 = vmatpush1.bf16.msra.mxu0 %v1192
        %1408 = vmatprep.subr.bf16.mxu0 %v1195
        %1409 = vmatpush1.bf16.msra.mxu0 %v1194
        %1410 = vmatprep.subr.bf16.mxu0 %v1197
        %1411 = vmatpush1.bf16.msra.mxu0 %v1196
        %1412 = vmatprep.subr.bf16.mxu0 %v1199
        %1413 = vmatpush1.bf16.msra.mxu0 %v1198
        %1414 = vmatprep.subr.bf16.mxu0 %v1201
        %1415 = vmatpush1.bf16.msra.mxu0 %v1200
        %1416 = vmatprep.subr.bf16.mxu0 %v1203
        %1417 = vmatpush1.bf16.msra.mxu0 %v1202
        %1418 = vmatprep.subr.bf16.mxu0 %v1205
        %1419 = vmatpush1.bf16.msra.mxu0 %v1204
        %1420 = vmatprep.subr.bf16.mxu0 %v1207
        %1421 = vmatpush1.bf16.msra.mxu0 %v1206
        %1422 = vmatprep.subr.bf16.mxu0 %v1209
        %1423 = vmatpush1.bf16.msra.mxu0 %v1208
        %1424 = vmatprep.subr.bf16.mxu0 %v1211
        %1425 = vmatpush1.bf16.msra.mxu0 %v1210
        %1426 = vmatprep.subr.bf16.mxu0 %v1213
        %1427 = vmatpush1.bf16.msra.mxu0 %v1212
        %1428 = vmatprep.subr.bf16.mxu0 %v1215
        %1429 = vmatpush1.bf16.msra.mxu0 %v1214
        %1430 = vmatprep.subr.bf16.mxu0 %v1217
        %1431 = vmatpush1.bf16.msra.mxu0 %v1216
        %1432 = vmatprep.subr.bf16.mxu0 %v1219
        %1433 = vmatpush1.bf16.msra.mxu0 %v1218
        %1434 = vmatprep.subr.bf16.mxu0 %v1221
        %1435 = vmatpush1.bf16.msra.mxu0 %v1220
        %1436 = vmatprep.subr.bf16.mxu0 %v1223
        %1437 = vmatpush1.bf16.msra.mxu0 %v1222
        %1438 = vmatprep.mubr.bf16.mxu0 %v732
        %1439 = vmatmul.mubr.bf16.gmra.mrb[0].mxu0 %v731
        %v1440 = vpop.f32.mrb[0].mxu0
        %v1441 = vadd.f32 %v1398, %v1440
        %v1442 = vpop.f32.mrb[0].mxu0
        %v1443 = vadd.f32 %v1400, %v1442
        %v1444 = vpop.f32.mrb[0].mxu0
        %v1445 = vadd.f32 %v1402, %v1444
        %v1446 = vpop.f32.mrb[0].mxu0
        %v1447 = vadd.f32 %v1404, %v1446
        %1448 = vdwg.mxu0
        %v1449 = vadd.f32 %v1441, %v1443
        %1450 = vadd.xlane.f32.xlu0 %v1449
        %v1451 = vpop.xlane.xlu0 %1450
        %v1452 = vadd.f32 %v1445, %v1447
        %1453 = vadd.xlane.f32.xlu0 %v1452
        %v1454 = vpop.xlane.xlu0 %1453
        %v1455 = vmul.f32 %v1451, %v602
        %v1456 = vmul.f32 %v1454, %v602
        %v1457 = vmul.f32 %v1441, %v1441
        %v1458 = vmul.f32 %v1443, %v1443
        %v1459 = vmul.f32 %v1445, %v1445
        %v1460 = vmul.f32 %v1447, %v1447
        %v1461 = vadd.f32 %v1457, %v1458
        %1462 = vadd.xlane.f32.xlu0 %v1461
        %v1463 = vpop.xlane.xlu0 %1462
        %v1464 = vadd.f32 %v1459, %v1460
        %1465 = vadd.xlane.f32.xlu0 %v1464
        %v1466 = vpop.xlane.xlu0 %1465
        %v1467 = vmul.f32 %v1463, %v602
        %v1468 = vmul.f32 %v1466, %v602
        %v1469 = vmul.f32 %v1455, %v1455
        %v1470 = vmul.f32 %v1456, %v1456
        %v1471 = vsub.f32 %v1467, %v1469
        %v1472 = vsub.f32 %v1468, %v1470
        %v1473 = vmax.f32 %v1471, 0.0
        %v1474 = vmax.f32 %v1472, 0.0
        %v1475 = vsub.f32 %v1441, %v1455
        %v1476 = vsub.f32 %v1443, %v1455
        %v1477 = vsub.f32 %v1445, %v1456
        %v1478 = vsub.f32 %v1447, %v1456
        %v1479 = vadd.f32 %v1473, 1e-05
        %v1480 = vadd.f32 %v1474, 1e-05
        %v1481 = vrsqrt.pop %v1479
        %v1482 = vrsqrt.pop %v1480
        %v1483 = vmul.f32 %v1475, %v1481
        %v1484 = vmul.f32 %v1476, %v1481
        %v1485 = vmul.f32 %v1477, %v1482
        %v1486 = vmul.f32 %v1478, %v1482
        %v1488 = vlaneseq
        %v1489 = vshrl.u32 %v1488, 7
        %v1490 = vsub.s32 0, %v1489
        %v1491 = vrot.slane %v204, %v1490
        %v1492 = vlaneseq
        %v1493 = vshrl.u32 %v1492, 7
        %v1494 = vsub.s32 1, %v1493
        %v1495 = vrot.slane %v204, %v1494
        %v1498 = vmul.f32 %v1483, %v1491
        %v1499 = vmul.f32 %v1484, %v1495
        %v1500 = vmul.f32 %v1485, %v1491
        %v1501 = vmul.f32 %v1486, %v1495
        %v1503 = vlaneseq
        %v1504 = vshrl.u32 %v1503, 7
        %v1505 = vsub.s32 0, %v1504
        %v1506 = vrot.slane %v206, %v1505
        %v1507 = vlaneseq
        %v1508 = vshrl.u32 %v1507, 7
        %v1509 = vsub.s32 1, %v1508
        %v1510 = vrot.slane %v206, %v1509
        %v1513 = vadd.f32 %v1498, %v1506
        %v1514 = vadd.f32 %v1499, %v1510
        %v1515 = vadd.f32 %v1500, %v1506
        %v1516 = vadd.f32 %v1501, %v1510
        %v1517 = vmax.f32 %v1513, 0.0
        %v1518 = vmax.f32 %v1514, 0.0
        %v1519 = vmax.f32 %v1515, 0.0
        %v1520 = vmax.f32 %v1516, 0.0
        %v1522 = vlaneseq
        %v1523 = vshrl.u32 %v1522, 7
        %v1524 = vsub.s32 0, %v1523
        %v1525 = vrot.slane %v208, %v1524
        %v1526 = vlaneseq
        %v1527 = vshrl.u32 %v1526, 7
        %v1528 = vsub.s32 1, %v1527
        %v1529 = vrot.slane %v208, %v1528
        %v1532 = vmul.f32 %v1517, %v1525
        %v1533 = vmul.f32 %v1518, %v1529
        %v1534 = vmul.f32 %v1519, %v1525
        %v1535 = vmul.f32 %v1520, %v1529
        %v1536 = vadd.f32 %v1532, %v1533
        %1537 = vadd.xlane.f32.xlu0 %v1536
        %v1538 = vpop.xlane.xlu0 %1537
        %v1539 = vadd.f32 %v1534, %v1535
        %1540 = vadd.xlane.f32.xlu0 %v1539
        %v1541 = vpop.xlane.xlu0 %1540
        %1543 = vset.pattern.permute.xlu0 0
        %1544 = vperm.xlu0 %1543, %v209
        %v1545 = vpop.permute.xlu0 %1544
        %v1547 = vadd.f32 %v1538, %v1545
        %v1548 = vadd.f32 %v1541, %v1545
        %v1549 = vmax.f32 %v1547, 0.0
        %v1550 = vmax.f32 %v1548, 0.0
        %v1553 = vlaneseq
        %v1554 = vand.u32 %v1553, 127
        %v1555 = vlaneseq
        %v1556 = vshrl.u32 %v1555, 7
        %v1557 = vsub.s32 %v1554, %v1556
        %v1558 = vrot.slane %v1549, %v1557
        %v1559 = vadd.s32 %v1554, 4294967288
        %v1560 = vlaneseq
        %v1561 = vshrl.u32 %v1560, 7
        %v1562 = vsub.s32 %v1559, %v1561
        %v1563 = vrot.slane %v1550, %v1562
        %vm1564 = vcmask 130112
        %v1565 = vsel %vm1564, %v1563, %v1558
        %vm1567 = vcmask 122880
        %1568 = vst.msk [vmem:[%s189] sm:$0x1] %vm1567, %v1565
        %s1569 = sand.u32 %s115, 1
        %s1570 = scalar_lea.sflag [#allocation5], %s1569
        %s1571 = sand.u32 %s115, 1
        %s1572 = scalar_lea.vmem [#allocation4], %s1571
        // Predicated region
        $region37: #{energy_predictor_pallas.1} parent=35 // pred_check
          %p1573 = pneg %p125
        $region38: #{energy_predictor_pallas.1} parent=35 // pred_check_branch
          %1575 = sbr.rel (%p1573) target = $region40
        $region39: #{energy_predictor_pallas.1} parent=35 // pred_region
          %s1577 = ssub.s32 16, 16
          %1578 = vsyncadd %s1570, %s1577
          %s1579 = smul.addr %s18, 16
          %s1580 = scalar_lea.hbm %s4, %s1579
          %s1582 = sshll.u32 %s1572, 4
          %s1583 = int_to_ptr.vmem [resolvable:$true] %s1582
          %1585 = dma.vmem_to_hbm [thread:$0]  %s1583, 16, %s1580, %s1570
        $region40: #{energy_predictor_pallas.1} parent=35 // pred_fallthru
          _
      $region36: #{energy_predictor_pallas.1} parent=5 // pred_fallthru
        _
      %p1586 = scmp.le.s32.totalorder 2, %s13
      // Predicated region
      $region41: #{energy_predictor_pallas.1} parent=5 // pred_check
        %p1587 = pneg %p1586
      $region42: #{energy_predictor_pallas.1} parent=5 // pred_check_branch
        %1589 = sbr.rel (%p1587) target = $region44
      $region43: #{energy_predictor_pallas.1} parent=5 // pred_region
        %s1590 = ssub.s32 %s13, 2
        // Predicated region
        $region45: #{energy_predictor_pallas.1} parent=43 // pred_check
          %p1591 = pneg %p131
        $region46: #{energy_predictor_pallas.1} parent=43 // pred_check_branch
          %1593 = sbr.rel (%p1591) target = $region48
        $region47: #{energy_predictor_pallas.1} parent=43 // pred_region
          %s1594 = sand.u32 %s116, 1
          %s1595 = scalar_lea.sflag [#allocation5], %s1594
          %s1596 = sand.u32 %s116, 1
          %s1597 = scalar_lea.vmem [#allocation4], %s1596
          %1598 = dma.done %s1595, 16
        $region48: #{energy_predictor_pallas.1} parent=43 // pred_fallthru
          _
      $region44: #{energy_predictor_pallas.1} parent=5 // pred_fallthru
        _
    $region6: #{energy_predictor_pallas.1} parent=1 // loop_footer
      %s17 = sadd.s32 1, %s13
    $region7: #{energy_predictor_pallas.1} parent=1 // loop_footer_branch
      %12 = sbr.rel target = $region3
    $region8: #{energy_predictor_pallas.1} parent=1 // loop_exit
      _
    %1599 = vsyncpa [#allocation5], 1
    %s1600 = scalar_lea.sflag [#allocation5], 1
    %1601 = vsyncpa %s1600, 1

</llo_original>
